<compile_context>
chip_gen: v6e
topology: v6e:2x2x1
jax: 0.10.0
libtpu: 0.0.40
codegen_flags: <defaults>
</compile_context>

<pallas_src>
import functools

import jax
import jax.numpy as jnp
from jax.experimental import pallas as pl
from jax.experimental.pallas import tpu as pltpu

LN_EPS = 1e-5  # PyTorch nn.LayerNorm default
INV_SQRT2 = 0.7071067811865476


def _encoder_kernel(num_heads, head_dim, batch_per_tile, seq,
                    x_hbm, wqkv_ref, wo_ref, w1_ref, w2_ref, vec_ref,
                    o_ref,
                    ctx_ref, seed_sem):
    """One grid step == one TransformerEncoderLayer over one batch tile of (R, E) rows.

    The output block (constant index across the layer axis) stays resident in VMEM and
    is the layer-to-layer activation carry for this batch tile.
    """
    b = pl.program_id(0)          # batch-tile index ("parallel")
    l = pl.program_id(1)          # layer index ("arbitrary", innermost)
    H, Dh, Bt, S = num_heads, head_dim, batch_per_tile, seq
    E = H * Dh
    E3 = 3 * E
    M = w1_ref.shape[-1]
    R = Bt * S                    # rows in this tile

    # Seed the carried activation once per batch tile straight from HBM (x holds no
    # resident VMEM block of its own).
    @pl.when(l == 0)
    def _():
        start = pl.multiple_of(b * R, R)
        cp = pltpu.make_async_copy(x_hbm.at[pl.ds(start, R)], o_ref, seed_sem)
        cp.start()
        cp.wait()

    x = o_ref[...]                                   # (R, E) f32
    x_bf = x.astype(jnp.bfloat16)

    # Packed per-layer vectors (f32): rows are
    # [bqkv(3E), bo(E), g1(E), be1(E), b1(M), b2(E), g2(E), be2(E)], lane-padded to P.
    bqkv = vec_ref[0:1, 0:E3]
    bo   = vec_ref[1:2, 0:E]
    g1   = vec_ref[2:3, 0:E]
    be1  = vec_ref[3:4, 0:E]
    b1   = vec_ref[4:5, 0:M]
    b2   = vec_ref[5:6, 0:E]
    g2   = vec_ref[6:7, 0:E]
    be2  = vec_ref[7:8, 0:E]

    # ---- fused QKV projection: one wide MXU matmul (E x 3E); 1/sqrt(Dh) already folded
    # into the Q columns of Wqkv / bqkv at pack time.
    qkv = jnp.dot(x_bf, wqkv_ref[...],
                  preferred_element_type=jnp.float32) + bqkv            # (R, 3E) f32
    q = qkv[:, :E].astype(jnp.bfloat16)
    k = qkv[:, E:2 * E].astype(jnp.bfloat16)
    v = qkv[:, 2 * E:].astype(jnp.bfloat16)

    # ---- multi-head self-attention over this batch tile; each head's context is staged
    # into the VMEM scratch so the output projection is ONE full-E-contraction GEMM.
    # (H is small & static; each iteration ends at a scratch store, bounding live ranges.)
    for h in range(H):
        sl = slice(h * Dh, (h + 1) * Dh)
        qh = q[:, sl].reshape(Bt, S, Dh)
        kh = k[:, sl].reshape(Bt, S, Dh)
        vh = v[:, sl].reshape(Bt, S, Dh)
        s = jnp.einsum('bqd,bkd->bqk', qh, kh,
                       preferred_element_type=jnp.float32)              # (Bt, S, S) f32
        m = jnp.max(s, axis=-1, keepdims=True)
        e = jnp.exp(s - m)
        p = e * pl.reciprocal(jnp.sum(e, axis=-1, keepdims=True), approx=True)
        # attention dropout -> identity (eval mode)
        ctx_h = jnp.einsum('bqk,bkd->bqd', p.astype(jnp.bfloat16), vh,
                           preferred_element_type=jnp.float32)          # (Bt, S, Dh) f32
        ctx_ref[:, sl] = ctx_h.reshape(R, Dh)

    attn = jnp.dot(ctx_ref[...].astype(jnp.bfloat16), wo_ref[...],
                   preferred_element_type=jnp.float32) + bo             # (R, E) f32

    # ---- residual + LayerNorm1 (f32, single-pass variance) ----
    x1 = x + attn
    mu1 = jnp.mean(x1, axis=-1, keepdims=True)
    ms1 = jnp.mean(x1 * x1, axis=-1, keepdims=True)
    var1 = jnp.maximum(ms1 - mu1 * mu1, 0.0)
    x1n = (x1 - mu1) * jax.lax.rsqrt(var1 + LN_EPS) * g1 + be1

    # ---- MLP: Linear -> exact GELU (erf) -> Linear ----
    h1 = jnp.dot(x1n.astype(jnp.bfloat16), w1_ref[...],
                 preferred_element_type=jnp.float32) + b1               # (R, M) f32
    h1 = 0.5 * h1 * (1.0 + jax.lax.erf(h1 * INV_SQRT2))
    mlp = jnp.dot(h1.astype(jnp.bfloat16), w2_ref[...],
                  preferred_element_type=jnp.float32) + b2              # (R, E) f32

    # ---- residual + LayerNorm2 (f32, single-pass variance) ----
    x2 = x1n + mlp
    mu2 = jnp.mean(x2, axis=-1, keepdims=True)
    ms2 = jnp.mean(x2 * x2, axis=-1, keepdims=True)
    var2 = jnp.maximum(ms2 - mu2 * mu2, 0.0)
    o_ref[...] = (x2 - mu2) * jax.lax.rsqrt(var2 + LN_EPS) * g2 + be2   # carried / output


def _vmem_limit_bytes(rows, emb, mlp, batch_per_tile, seq):
    """Rough, generous VMEM budget for this kernel (re-derived for v7x's 64 MiB/TC)."""
    def tile_bytes(r, c, itemsize):
        return -(-r // 8) * 8 * (-(-c // 128)) * 128 * itemsize
    e3 = 3 * emb
    p = max(e3, mlp)
    weights = 2 * (tile_bytes(emb, e3, 2) + tile_bytes(emb, emb, 2)       # double-buffered
                   + tile_bytes(emb, mlp, 2) + tile_bytes(mlp, emb, 2)
                   + tile_bytes(8, p, 4))
    acts = (3 * tile_bytes(rows, emb, 4) + tile_bytes(rows, e3, 4)
            + tile_bytes(rows, mlp, 4) + tile_bytes(rows, emb, 4)         # ctx scratch
            + 2 * batch_per_tile * tile_bytes(seq, seq, 4))               # scores / exp
    est = weights + 2 * acts + (8 << 20)                                  # compiler headroom
    return int(min(max(est, 16 << 20), 64 << 20))


def prepare_params(layer_params, *, num_heads):
    """One-time packing of per-layer weights (hoisted out of the per-forward hot path).

    Fuses Wq/Wk/Wv into a single (E, 3E) bf16 matrix with 1/sqrt(Dh) folded into the Q
    columns, casts all big weights to bf16, and coalesces the 8 small per-layer vectors
    into one (L, 8, P) f32 array.
    """
    E = layer_params[0]["wq"].shape[0]
    M = layer_params[0]["w1"].shape[1]
    Dh = E // num_heads
    scale = 1.0 / (Dh ** 0.5)
    P = max(3 * E, M)

    wqkv = jnp.stack([jnp.concatenate([p["wq"] * scale, p["wk"], p["wv"]], axis=1)
                      for p in layer_params]).astype(jnp.bfloat16)        # (L, E, 3E)
    wo = jnp.stack([p["wo"] for p in layer_params]).astype(jnp.bfloat16)  # (L, E, E)
    w1 = jnp.stack([p["w1"] for p in layer_params]).astype(jnp.bfloat16)  # (L, E, M)
    w2 = jnp.stack([p["w2"] for p in layer_params]).astype(jnp.bfloat16)  # (L, M, E)

    def pad_row(v):
        v = v.reshape(-1).astype(jnp.float32)
        return jnp.pad(v, (0, P - v.shape[0]))

    vec_rows = []
    for p in layer_params:
        bqkv = jnp.concatenate([p["bq"] * scale, p["bk"], p["bv"]], axis=1)
        rows = [bqkv, p["bo"], p["g1"], p["be1"], p["b1"], p["b2"], p["g2"], p["be2"]]
        vec_rows.append(jnp.stack([pad_row(r) for r in rows]))
    vecs = jnp.stack(vec_rows)                                            # (L, 8, P) f32

    return {"wqkv": wqkv, "wo": wo, "w1": w1, "w2": w2, "vecs": vecs}


def transformer_encoder(x, weights, *, num_heads, num_batch_tiles=None):
    """Run the full L-layer encoder in a single Pallas kernel. x: (B, S, E) float32."""
    B, S, E = x.shape
    L = weights["wqkv"].shape[0]
    M = weights["w1"].shape[2]
    P = weights["vecs"].shape[2]
    Dh = E // num_heads

    # Batch-tile "parallel" axis (uses both TensorCores on v7x). Tiles must cover whole
    # batch elements and keep a sublane-aligned row count.
    if num_batch_tiles is None:
        num_batch_tiles = 2 if (B % 2 == 0 and ((B // 2) * S) % 8 == 0) else 1
    assert B % num_batch_tiles == 0
    Bt = B // num_batch_tiles
    R = Bt * S
    assert num_batch_tiles == 1 or R % 8 == 0

    x2d = x.reshape(B * S, E).astype(jnp.float32)

    perlayer = lambda r, c: pl.BlockSpec((None, r, c), lambda b, l: (l, 0, 0))
    kernel = functools.partial(_encoder_kernel, num_heads, Dh, Bt, S)

    out2d = pl.pallas_call(
        kernel,
        out_shape=jax.ShapeDtypeStruct((B * S, E), jnp.float32),
        grid_spec=pltpu.PrefetchScalarGridSpec(
            num_scalar_prefetch=0,
            grid=(num_batch_tiles, L),
            in_specs=[
                pl.BlockSpec(memory_space=pl.ANY),       # x: raw HBM, seeded once per tile
                perlayer(E, 3 * E),                      # Wqkv (bf16, Q-scale folded)
                perlayer(E, E),                          # Wo   (bf16)
                perlayer(E, M),                          # W1   (bf16)
                perlayer(M, E),                          # W2   (bf16)
                perlayer(8, P),                          # packed biases / LN params (f32)
            ],
            out_specs=pl.BlockSpec((R, E), lambda b, l: (b, 0)),  # resident carry per tile
            scratch_shapes=[
                pltpu.VMEM((R, E), jnp.float32),         # per-head ctx staging for Wo GEMM
                pltpu.SemaphoreType.DMA,                 # x seed copy semaphore
            ],
        ),
        compiler_params=pltpu.CompilerParams(
            dimension_semantics=("parallel", "arbitrary"),
            vmem_limit_bytes=_vmem_limit_bytes(R, E, M, Bt, S),
        ),
    )(x2d, weights["wqkv"], weights["wo"], weights["w1"], weights["w2"], weights["vecs"])
    return out2d.reshape(B, S, E)


def init_layer_params(key, emb_dim, mlp_dim):
    ks = jax.random.split(key, 10)
    n = lambda k, shape, s=0.05: (s * jax.random.normal(k, shape)).astype(jnp.float32)
    return {
        "wq": n(ks[0], (emb_dim, emb_dim)), "bq": n(ks[1], (1, emb_dim)),
        "wk": n(ks[2], (emb_dim, emb_dim)), "bk": n(ks[3], (1, emb_dim)),
        "wv": n(ks[4], (emb_dim, emb_dim)), "bv": n(ks[5], (1, emb_dim)),
        "wo": n(ks[6], (emb_dim, emb_dim)), "bo": n(ks[7], (1, emb_dim)),
        "g1": jnp.ones((1, emb_dim), jnp.float32), "be1": jnp.zeros((1, emb_dim), jnp.float32),
        "w1": n(ks[8], (emb_dim, mlp_dim)), "b1": jnp.zeros((1, mlp_dim), jnp.float32),
        "w2": n(ks[9], (mlp_dim, emb_dim)), "b2": jnp.zeros((1, emb_dim), jnp.float32),
        "g2": jnp.ones((1, emb_dim), jnp.float32), "be2": jnp.zeros((1, emb_dim), jnp.float32),
    }


def reference_layer(x, p, num_heads):
    """Pure-JAX f32 reference of one layer (eval mode), for correctness checking."""
    B, S, E = x.shape
    Dh = E // num_heads
    q = x @ p["wq"] + p["bq"]
    k = x @ p["wk"] + p["bk"]
    v = x @ p["wv"] + p["bv"]
    def split(t):
        return t.reshape(B, S, num_heads, Dh).transpose(0, 2, 1, 3)
    qh, kh, vh = split(q), split(k), split(v)
    s = jnp.einsum("bhsd,bhtd->bhst", qh, kh) / (Dh ** 0.5)
    w = jax.nn.softmax(s, axis=-1)
    ctx = jnp.einsum("bhst,bhtd->bhsd", w, vh).transpose(0, 2, 1, 3).reshape(B, S, E)
    attn_out = ctx @ p["wo"] + p["bo"]
    x1 = x + attn_out
    mu = x1.mean(-1, keepdims=True); var = ((x1 - mu) ** 2).mean(-1, keepdims=True)
    x1n = (x1 - mu) / jnp.sqrt(var + LN_EPS) * p["g1"] + p["be1"]
    h = x1n @ p["w1"] + p["b1"]
    h = jax.nn.gelu(h, approximate=False)
    mlp_out = h @ p["w2"] + p["b2"]
    x2 = x1n + mlp_out
    mu2 = x2.mean(-1, keepdims=True); var2 = ((x2 - mu2) ** 2).mean(-1, keepdims=True)
    return (x2 - mu2) / jnp.sqrt(var2 + LN_EPS) * p["g2"] + p["be2"]


if __name__ == "__main__":
    # Small config: emb_dim=32, num_heads=4, num_layers=2, mlp_dim=64,
    # include_mlp=True, modification='unchanged'.
    # NOTE: all lane dims here are < 128, so this exercises correctness, not MXU perf.
    B, S, E, H, M, L = 2, 8, 32, 4, 64, 2

    key = jax.random.PRNGKey(0)
    kx, *layer_keys = jax.random.split(key, L + 1)
    x = jax.random.normal(kx, (B, S, E), dtype=jnp.float32)
    layer_params = [init_layer_params(k, E, M) for k in layer_keys]

    # One-time weight packing (hoisted out of the forward hot path).
    packed = prepare_params(layer_params, num_heads=H)
    packed = jax.tree_util.tree_map(jax.block_until_ready, packed)

    out = transformer_encoder(x, packed, num_heads=H)
    out = jax.block_until_ready(out)

    # sanity check vs pure-JAX f32 reference (bf16 matmuls + approx reciprocal in kernel)
    ref = x
    for p in layer_params:
        ref = reference_layer(ref, p, H)
    ref = jax.block_until_ready(ref)

    assert out.shape == (B, S, E)
    assert bool(jnp.all(jnp.isfinite(out)))
    err = float(jnp.max(jnp.abs(out - ref)))
    assert err < 2e-2, f"mismatch vs reference: {err}"

    print("KERNEL_OK")
</pallas_src>

<mosaic_0001>
module attributes {stable_mosaic.version = 11 : i64} {
  func.func @_encoder_kernel(%arg0: i32, %arg1: i32, %arg2: memref<16x32xf32, #tpu.memory_space<any>>, %arg3: memref<1x32x96xbf16, #tpu.memory_space<vmem>>, %arg4: memref<1x32x32xbf16, #tpu.memory_space<vmem>>, %arg5: memref<1x32x64xbf16, #tpu.memory_space<vmem>>, %arg6: memref<1x64x32xbf16, #tpu.memory_space<vmem>>, %arg7: memref<1x8x96xf32, #tpu.memory_space<vmem>>, %arg8: memref<8x32xf32, #tpu.memory_space<vmem>>, %arg9: memref<8x32xf32, #tpu.memory_space<vmem>>, %arg10: memref<!tpu.dma_semaphore, #tpu.memory_space<semaphore_mem>>) attributes {dimension_semantics = [#tpu.dimension_semantics<parallel>, #tpu.dimension_semantics<arbitrary>], iteration_bounds = array<i64: 2, 2>, scalar_prefetch = 0 : i64, scratch_operands = 2 : i64, tpu.core_type = #tpu.core_type<tc>, window_params = [{}, {transform_indices = @transform_1, window_bounds = array<i64: 1, 32, 96>}, {transform_indices = @transform_2, window_bounds = array<i64: 1, 32, 32>}, {transform_indices = @transform_3, window_bounds = array<i64: 1, 32, 64>}, {transform_indices = @transform_4, window_bounds = array<i64: 1, 64, 32>}, {transform_indices = @transform_5, window_bounds = array<i64: 1, 8, 96>}, {transform_indices = @transform_6, window_bounds = array<i64: 8, 32>}]} {
    %c0_i32 = arith.constant 0 : i32
    %0 = arith.cmpi eq, %arg1, %c0_i32 : i32
    %1 = arith.extui %0 : i1 to i32
    %c0_i32_0 = arith.constant 0 : i32
    %2 = arith.cmpi ne, %1, %c0_i32_0 : i32
    scf.if %2 {
      %c8_i32 = arith.constant 8 : i32
      %194 = arith.muli %arg0, %c8_i32 : i32
      %195 = tpu.assume_multiple %194, 8 : i32
      %c0_i32_74 = arith.constant 0 : i32
      %196 = tpu.memref_slice %arg2[%195, %c0_i32_74] : memref<16x32xf32, #tpu.memory_space<any>> -> memref<8x32xf32, #tpu.memory_space<any>>
      tpu.enqueue_dma source(%196 : memref<8x32xf32, #tpu.memory_space<any>>) target(%arg8 : memref<8x32xf32, #tpu.memory_space<vmem>>) target_semaphore(%arg10 : memref<!tpu.dma_semaphore, #tpu.memory_space<semaphore_mem>>)
      %c0_i32_75 = arith.constant 0 : i32
      %197 = tpu.memref_slice %arg2[%195, %c0_i32_75] : memref<16x32xf32, #tpu.memory_space<any>> -> memref<8x32xf32, #tpu.memory_space<any>>
      tpu.wait_dma2 semaphore(%arg10 : memref<!tpu.dma_semaphore, #tpu.memory_space<semaphore_mem>>) src(%197 : memref<8x32xf32, #tpu.memory_space<any>>) dst(%arg8 : memref<8x32xf32, #tpu.memory_space<vmem>>)
    } else {
    }
    %c0 = arith.constant 0 : index
    %c0_1 = arith.constant 0 : index
    %3 = vector.load %arg8[%c0, %c0_1] : memref<8x32xf32, #tpu.memory_space<vmem>>, vector<8x32xf32>
    %4 = arith.truncf %3 : vector<8x32xf32> to vector<8x32xbf16>
    %c0_2 = arith.constant 0 : index
    %c0_3 = arith.constant 0 : index
    %c0_4 = arith.constant 0 : index
    %5 = vector.load %arg7[%c0_2, %c0_3, %c0_4] : memref<1x8x96xf32, #tpu.memory_space<vmem>>, vector<1x1x96xf32>
    %6 = vector.shape_cast %5 : vector<1x1x96xf32> to vector<1x96xf32>
    %c0_5 = arith.constant 0 : index
    %c1 = arith.constant 1 : index
    %c0_6 = arith.constant 0 : index
    %7 = vector.load %arg7[%c0_5, %c1, %c0_6] : memref<1x8x96xf32, #tpu.memory_space<vmem>>, vector<1x1x32xf32>
    %8 = vector.shape_cast %7 : vector<1x1x32xf32> to vector<1x32xf32>
    %c0_7 = arith.constant 0 : index
    %c2 = arith.constant 2 : index
    %c0_8 = arith.constant 0 : index
    %9 = vector.load %arg7[%c0_7, %c2, %c0_8] : memref<1x8x96xf32, #tpu.memory_space<vmem>>, vector<1x1x32xf32>
    %10 = vector.shape_cast %9 : vector<1x1x32xf32> to vector<1x32xf32>
    %c0_9 = arith.constant 0 : index
    %c3 = arith.constant 3 : index
    %c0_10 = arith.constant 0 : index
    %11 = vector.load %arg7[%c0_9, %c3, %c0_10] : memref<1x8x96xf32, #tpu.memory_space<vmem>>, vector<1x1x32xf32>
    %12 = vector.shape_cast %11 : vector<1x1x32xf32> to vector<1x32xf32>
    %c0_11 = arith.constant 0 : index
    %c4 = arith.constant 4 : index
    %c0_12 = arith.constant 0 : index
    %13 = vector.load %arg7[%c0_11, %c4, %c0_12] : memref<1x8x96xf32, #tpu.memory_space<vmem>>, vector<1x1x64xf32>
    %14 = vector.shape_cast %13 : vector<1x1x64xf32> to vector<1x64xf32>
    %c0_13 = arith.constant 0 : index
    %c5 = arith.constant 5 : index
    %c0_14 = arith.constant 0 : index
    %15 = vector.load %arg7[%c0_13, %c5, %c0_14] : memref<1x8x96xf32, #tpu.memory_space<vmem>>, vector<1x1x32xf32>
    %16 = vector.shape_cast %15 : vector<1x1x32xf32> to vector<1x32xf32>
    %c0_15 = arith.constant 0 : index
    %c6 = arith.constant 6 : index
    %c0_16 = arith.constant 0 : index
    %17 = vector.load %arg7[%c0_15, %c6, %c0_16] : memref<1x8x96xf32, #tpu.memory_space<vmem>>, vector<1x1x32xf32>
    %18 = vector.shape_cast %17 : vector<1x1x32xf32> to vector<1x32xf32>
    %c0_17 = arith.constant 0 : index
    %c7 = arith.constant 7 : index
    %c0_18 = arith.constant 0 : index
    %19 = vector.load %arg7[%c0_17, %c7, %c0_18] : memref<1x8x96xf32, #tpu.memory_space<vmem>>, vector<1x1x32xf32>
    %20 = vector.shape_cast %19 : vector<1x1x32xf32> to vector<1x32xf32>
    %c0_19 = arith.constant 0 : index
    %c0_20 = arith.constant 0 : index
    %c0_21 = arith.constant 0 : index
    %21 = vector.load %arg3[%c0_19, %c0_20, %c0_21] : memref<1x32x96xbf16, #tpu.memory_space<vmem>>, vector<1x32x96xbf16>
    %22 = vector.shape_cast %21 : vector<1x32x96xbf16> to vector<32x96xbf16>
    %cst = arith.constant dense<0.000000e+00> : vector<8x96xf32>
    %23 = tpu.matmul %4, %22, %cst {dimension_numbers = #tpu.dot_dimension_numbers<[1], [0], [0], [1], [0, 0, 1, 1], [], []>} : vector<8x32xbf16>, vector<32x96xbf16>, vector<8x96xf32> -> vector<8x96xf32>
    %24 = vector.broadcast %6 : vector<1x96xf32> to vector<8x96xf32>
    %25 = arith.addf %23, %24 : vector<8x96xf32>
    %26 = vector.extract_strided_slice %25 {offsets = [0, 0], sizes = [8, 32], strides = [1, 1]} : vector<8x96xf32> to vector<8x32xf32>
    %27 = arith.truncf %26 : vector<8x32xf32> to vector<8x32xbf16>
    %28 = vector.extract_strided_slice %25 {offsets = [0, 32], sizes = [8, 32], strides = [1, 1]} : vector<8x96xf32> to vector<8x32xf32>
    %29 = arith.truncf %28 : vector<8x32xf32> to vector<8x32xbf16>
    %30 = vector.extract_strided_slice %25 {offsets = [0, 64], sizes = [8, 32], strides = [1, 1]} : vector<8x96xf32> to vector<8x32xf32>
    %31 = arith.truncf %30 : vector<8x32xf32> to vector<8x32xbf16>
    %32 = vector.extract_strided_slice %27 {offsets = [0, 0], sizes = [8, 8], strides = [1, 1]} : vector<8x32xbf16> to vector<8x8xbf16>
    %33 = vector.shape_cast %32 : vector<8x8xbf16> to vector<1x8x8xbf16>
    %34 = vector.extract_strided_slice %29 {offsets = [0, 0], sizes = [8, 8], strides = [1, 1]} : vector<8x32xbf16> to vector<8x8xbf16>
    %35 = vector.shape_cast %34 : vector<8x8xbf16> to vector<1x8x8xbf16>
    %36 = vector.extract_strided_slice %31 {offsets = [0, 0], sizes = [8, 8], strides = [1, 1]} : vector<8x32xbf16> to vector<8x8xbf16>
    %37 = vector.shape_cast %36 : vector<8x8xbf16> to vector<1x8x8xbf16>
    "tpu.trace_start"() <{level = 10 : i32, message = "bqd,bkd->bqk"}> : () -> ()
    %cst_22 = arith.constant dense<0.000000e+00> : vector<1x8x8xf32>
    %38 = tpu.matmul %33, %35, %cst_22 {dimension_numbers = #tpu.dot_dimension_numbers<[2], [2], [1], [1], [0, 0, 0, 1, 1, 1], [0], [0]>} : vector<1x8x8xbf16>, vector<1x8x8xbf16>, vector<1x8x8xf32> -> vector<1x8x8xf32>
    "tpu.trace_stop"() : () -> ()
    %cst_23 = arith.constant dense<0xFF800000> : vector<1x8xf32>
    %39 = vector.multi_reduction <maximumf>, %38, %cst_23 [2] : vector<1x8x8xf32> to vector<1x8xf32>
    %40 = vector.shape_cast %39 : vector<1x8xf32> to vector<1x8x1xf32>
    %41 = vector.broadcast %40 : vector<1x8x1xf32> to vector<1x8x8xf32>
    %42 = arith.subf %38, %41 : vector<1x8x8xf32>
    %43 = math.exp %42 : vector<1x8x8xf32>
    %cst_24 = arith.constant dense<0.000000e+00> : vector<1x8xf32>
    %44 = vector.multi_reduction <add>, %43, %cst_24 [2] : vector<1x8x8xf32> to vector<1x8xf32>
    %45 = vector.shape_cast %44 : vector<1x8xf32> to vector<1x8x1xf32>
    %46 = tpu.reciprocal %45 {approx = true} : vector<1x8x1xf32> -> vector<1x8x1xf32>
    %47 = vector.broadcast %46 : vector<1x8x1xf32> to vector<1x8x8xf32>
    %48 = arith.mulf %43, %47 : vector<1x8x8xf32>
    %49 = arith.truncf %48 : vector<1x8x8xf32> to vector<1x8x8xbf16>
    "tpu.trace_start"() <{level = 10 : i32, message = "bqk,bkd->bqd"}> : () -> ()
    %cst_25 = arith.constant dense<0.000000e+00> : vector<1x8x8xf32>
    %50 = tpu.matmul %49, %37, %cst_25 {dimension_numbers = #tpu.dot_dimension_numbers<[2], [1], [1], [2], [0, 0, 0, 1, 1, 2], [0], [0]>} : vector<1x8x8xbf16>, vector<1x8x8xbf16>, vector<1x8x8xf32> -> vector<1x8x8xf32>
    "tpu.trace_stop"() : () -> ()
    %51 = vector.shape_cast %50 : vector<1x8x8xf32> to vector<8x8xf32>
    %c0_26 = arith.constant 0 : index
    %c0_27 = arith.constant 0 : index
    %52 = vector.load %arg9[%c0_26, %c0_27] : memref<8x32xf32, #tpu.memory_space<vmem>>, vector<8x8xf32>
    tpu.vector_store %arg9[%c0_26, %c0_27], %51 {strides = array<i32>} : memref<8x32xf32, #tpu.memory_space<vmem>>, vector<8x8xf32>,
    %53 = vector.extract_strided_slice %27 {offsets = [0, 8], sizes = [8, 8], strides = [1, 1]} : vector<8x32xbf16> to vector<8x8xbf16>
    %54 = vector.shape_cast %53 : vector<8x8xbf16> to vector<1x8x8xbf16>
    %55 = vector.extract_strided_slice %29 {offsets = [0, 8], sizes = [8, 8], strides = [1, 1]} : vector<8x32xbf16> to vector<8x8xbf16>
    %56 = vector.shape_cast %55 : vector<8x8xbf16> to vector<1x8x8xbf16>
    %57 = vector.extract_strided_slice %31 {offsets = [0, 8], sizes = [8, 8], strides = [1, 1]} : vector<8x32xbf16> to vector<8x8xbf16>
    %58 = vector.shape_cast %57 : vector<8x8xbf16> to vector<1x8x8xbf16>
    "tpu.trace_start"() <{level = 10 : i32, message = "bqd,bkd->bqk"}> : () -> ()
    %cst_28 = arith.constant dense<0.000000e+00> : vector<1x8x8xf32>
    %59 = tpu.matmul %54, %56, %cst_28 {dimension_numbers = #tpu.dot_dimension_numbers<[2], [2], [1], [1], [0, 0, 0, 1, 1, 1], [0], [0]>} : vector<1x8x8xbf16>, vector<1x8x8xbf16>, vector<1x8x8xf32> -> vector<1x8x8xf32>
    "tpu.trace_stop"() : () -> ()
    %cst_29 = arith.constant dense<0xFF800000> : vector<1x8xf32>
    %60 = vector.multi_reduction <maximumf>, %59, %cst_29 [2] : vector<1x8x8xf32> to vector<1x8xf32>
    %61 = vector.shape_cast %60 : vector<1x8xf32> to vector<1x8x1xf32>
    %62 = vector.broadcast %61 : vector<1x8x1xf32> to vector<1x8x8xf32>
    %63 = arith.subf %59, %62 : vector<1x8x8xf32>
    %64 = math.exp %63 : vector<1x8x8xf32>
    %cst_30 = arith.constant dense<0.000000e+00> : vector<1x8xf32>
    %65 = vector.multi_reduction <add>, %64, %cst_30 [2] : vector<1x8x8xf32> to vector<1x8xf32>
    %66 = vector.shape_cast %65 : vector<1x8xf32> to vector<1x8x1xf32>
    %67 = tpu.reciprocal %66 {approx = true} : vector<1x8x1xf32> -> vector<1x8x1xf32>
    %68 = vector.broadcast %67 : vector<1x8x1xf32> to vector<1x8x8xf32>
    %69 = arith.mulf %64, %68 : vector<1x8x8xf32>
    %70 = arith.truncf %69 : vector<1x8x8xf32> to vector<1x8x8xbf16>
    "tpu.trace_start"() <{level = 10 : i32, message = "bqk,bkd->bqd"}> : () -> ()
    %cst_31 = arith.constant dense<0.000000e+00> : vector<1x8x8xf32>
    %71 = tpu.matmul %70, %58, %cst_31 {dimension_numbers = #tpu.dot_dimension_numbers<[2], [1], [1], [2], [0, 0, 0, 1, 1, 2], [0], [0]>} : vector<1x8x8xbf16>, vector<1x8x8xbf16>, vector<1x8x8xf32> -> vector<1x8x8xf32>
    "tpu.trace_stop"() : () -> ()
    %72 = vector.shape_cast %71 : vector<1x8x8xf32> to vector<8x8xf32>
    %c0_32 = arith.constant 0 : index
    %c8 = arith.constant 8 : index
    %73 = vector.load %arg9[%c0_32, %c8] : memref<8x32xf32, #tpu.memory_space<vmem>>, vector<8x8xf32>
    tpu.vector_store %arg9[%c0_32, %c8], %72 {strides = array<i32>} : memref<8x32xf32, #tpu.memory_space<vmem>>, vector<8x8xf32>,
    %74 = vector.extract_strided_slice %27 {offsets = [0, 16], sizes = [8, 8], strides = [1, 1]} : vector<8x32xbf16> to vector<8x8xbf16>
    %75 = vector.shape_cast %74 : vector<8x8xbf16> to vector<1x8x8xbf16>
    %76 = vector.extract_strided_slice %29 {offsets = [0, 16], sizes = [8, 8], strides = [1, 1]} : vector<8x32xbf16> to vector<8x8xbf16>
    %77 = vector.shape_cast %76 : vector<8x8xbf16> to vector<1x8x8xbf16>
    %78 = vector.extract_strided_slice %31 {offsets = [0, 16], sizes = [8, 8], strides = [1, 1]} : vector<8x32xbf16> to vector<8x8xbf16>
    %79 = vector.shape_cast %78 : vector<8x8xbf16> to vector<1x8x8xbf16>
    "tpu.trace_start"() <{level = 10 : i32, message = "bqd,bkd->bqk"}> : () -> ()
    %cst_33 = arith.constant dense<0.000000e+00> : vector<1x8x8xf32>
    %80 = tpu.matmul %75, %77, %cst_33 {dimension_numbers = #tpu.dot_dimension_numbers<[2], [2], [1], [1], [0, 0, 0, 1, 1, 1], [0], [0]>} : vector<1x8x8xbf16>, vector<1x8x8xbf16>, vector<1x8x8xf32> -> vector<1x8x8xf32>
    "tpu.trace_stop"() : () -> ()
    %cst_34 = arith.constant dense<0xFF800000> : vector<1x8xf32>
    %81 = vector.multi_reduction <maximumf>, %80, %cst_34 [2] : vector<1x8x8xf32> to vector<1x8xf32>
    %82 = vector.shape_cast %81 : vector<1x8xf32> to vector<1x8x1xf32>
    %83 = vector.broadcast %82 : vector<1x8x1xf32> to vector<1x8x8xf32>
    %84 = arith.subf %80, %83 : vector<1x8x8xf32>
    %85 = math.exp %84 : vector<1x8x8xf32>
    %cst_35 = arith.constant dense<0.000000e+00> : vector<1x8xf32>
    %86 = vector.multi_reduction <add>, %85, %cst_35 [2] : vector<1x8x8xf32> to vector<1x8xf32>
    %87 = vector.shape_cast %86 : vector<1x8xf32> to vector<1x8x1xf32>
    %88 = tpu.reciprocal %87 {approx = true} : vector<1x8x1xf32> -> vector<1x8x1xf32>
    %89 = vector.broadcast %88 : vector<1x8x1xf32> to vector<1x8x8xf32>
    %90 = arith.mulf %85, %89 : vector<1x8x8xf32>
    %91 = arith.truncf %90 : vector<1x8x8xf32> to vector<1x8x8xbf16>
    "tpu.trace_start"() <{level = 10 : i32, message = "bqk,bkd->bqd"}> : () -> ()
    %cst_36 = arith.constant dense<0.000000e+00> : vector<1x8x8xf32>
    %92 = tpu.matmul %91, %79, %cst_36 {dimension_numbers = #tpu.dot_dimension_numbers<[2], [1], [1], [2], [0, 0, 0, 1, 1, 2], [0], [0]>} : vector<1x8x8xbf16>, vector<1x8x8xbf16>, vector<1x8x8xf32> -> vector<1x8x8xf32>
    "tpu.trace_stop"() : () -> ()
    %93 = vector.shape_cast %92 : vector<1x8x8xf32> to vector<8x8xf32>
    %c0_37 = arith.constant 0 : index
    %c16 = arith.constant 16 : index
    %94 = vector.load %arg9[%c0_37, %c16] : memref<8x32xf32, #tpu.memory_space<vmem>>, vector<8x8xf32>
    tpu.vector_store %arg9[%c0_37, %c16], %93 {strides = array<i32>} : memref<8x32xf32, #tpu.memory_space<vmem>>, vector<8x8xf32>,
    %95 = vector.extract_strided_slice %27 {offsets = [0, 24], sizes = [8, 8], strides = [1, 1]} : vector<8x32xbf16> to vector<8x8xbf16>
    %96 = vector.shape_cast %95 : vector<8x8xbf16> to vector<1x8x8xbf16>
    %97 = vector.extract_strided_slice %29 {offsets = [0, 24], sizes = [8, 8], strides = [1, 1]} : vector<8x32xbf16> to vector<8x8xbf16>
    %98 = vector.shape_cast %97 : vector<8x8xbf16> to vector<1x8x8xbf16>
    %99 = vector.extract_strided_slice %31 {offsets = [0, 24], sizes = [8, 8], strides = [1, 1]} : vector<8x32xbf16> to vector<8x8xbf16>
    %100 = vector.shape_cast %99 : vector<8x8xbf16> to vector<1x8x8xbf16>
    "tpu.trace_start"() <{level = 10 : i32, message = "bqd,bkd->bqk"}> : () -> ()
    %cst_38 = arith.constant dense<0.000000e+00> : vector<1x8x8xf32>
    %101 = tpu.matmul %96, %98, %cst_38 {dimension_numbers = #tpu.dot_dimension_numbers<[2], [2], [1], [1], [0, 0, 0, 1, 1, 1], [0], [0]>} : vector<1x8x8xbf16>, vector<1x8x8xbf16>, vector<1x8x8xf32> -> vector<1x8x8xf32>
    "tpu.trace_stop"() : () -> ()
    %cst_39 = arith.constant dense<0xFF800000> : vector<1x8xf32>
    %102 = vector.multi_reduction <maximumf>, %101, %cst_39 [2] : vector<1x8x8xf32> to vector<1x8xf32>
    %103 = vector.shape_cast %102 : vector<1x8xf32> to vector<1x8x1xf32>
    %104 = vector.broadcast %103 : vector<1x8x1xf32> to vector<1x8x8xf32>
    %105 = arith.subf %101, %104 : vector<1x8x8xf32>
    %106 = math.exp %105 : vector<1x8x8xf32>
    %cst_40 = arith.constant dense<0.000000e+00> : vector<1x8xf32>
    %107 = vector.multi_reduction <add>, %106, %cst_40 [2] : vector<1x8x8xf32> to vector<1x8xf32>
    %108 = vector.shape_cast %107 : vector<1x8xf32> to vector<1x8x1xf32>
    %109 = tpu.reciprocal %108 {approx = true} : vector<1x8x1xf32> -> vector<1x8x1xf32>
    %110 = vector.broadcast %109 : vector<1x8x1xf32> to vector<1x8x8xf32>
    %111 = arith.mulf %106, %110 : vector<1x8x8xf32>
    %112 = arith.truncf %111 : vector<1x8x8xf32> to vector<1x8x8xbf16>
    "tpu.trace_start"() <{level = 10 : i32, message = "bqk,bkd->bqd"}> : () -> ()
    %cst_41 = arith.constant dense<0.000000e+00> : vector<1x8x8xf32>
    %113 = tpu.matmul %112, %100, %cst_41 {dimension_numbers = #tpu.dot_dimension_numbers<[2], [1], [1], [2], [0, 0, 0, 1, 1, 2], [0], [0]>} : vector<1x8x8xbf16>, vector<1x8x8xbf16>, vector<1x8x8xf32> -> vector<1x8x8xf32>
    "tpu.trace_stop"() : () -> ()
    %114 = vector.shape_cast %113 : vector<1x8x8xf32> to vector<8x8xf32>
    %c0_42 = arith.constant 0 : index
    %c24 = arith.constant 24 : index
    %115 = vector.load %arg9[%c0_42, %c24] : memref<8x32xf32, #tpu.memory_space<vmem>>, vector<8x8xf32>
    tpu.vector_store %arg9[%c0_42, %c24], %114 {strides = array<i32>} : memref<8x32xf32, #tpu.memory_space<vmem>>, vector<8x8xf32>,
    %c0_43 = arith.constant 0 : index
    %c0_44 = arith.constant 0 : index
    %116 = vector.load %arg9[%c0_43, %c0_44] : memref<8x32xf32, #tpu.memory_space<vmem>>, vector<8x32xf32>
    %117 = arith.truncf %116 : vector<8x32xf32> to vector<8x32xbf16>
    %c0_45 = arith.constant 0 : index
    %c0_46 = arith.constant 0 : index
    %c0_47 = arith.constant 0 : index
    %118 = vector.load %arg4[%c0_45, %c0_46, %c0_47] : memref<1x32x32xbf16, #tpu.memory_space<vmem>>, vector<1x32x32xbf16>
    %119 = vector.shape_cast %118 : vector<1x32x32xbf16> to vector<32x32xbf16>
    %cst_48 = arith.constant dense<0.000000e+00> : vector<8x32xf32>
    %120 = tpu.matmul %117, %119, %cst_48 {dimension_numbers = #tpu.dot_dimension_numbers<[1], [0], [0], [1], [0, 0, 1, 1], [], []>} : vector<8x32xbf16>, vector<32x32xbf16>, vector<8x32xf32> -> vector<8x32xf32>
    %121 = vector.broadcast %8 : vector<1x32xf32> to vector<8x32xf32>
    %122 = arith.addf %120, %121 : vector<8x32xf32>
    %123 = arith.addf %3, %122 : vector<8x32xf32>
    %cst_49 = arith.constant dense<0.000000e+00> : vector<8xf32>
    %124 = vector.multi_reduction <add>, %123, %cst_49 [1] : vector<8x32xf32> to vector<8xf32>
    %125 = vector.shape_cast %124 : vector<8xf32> to vector<8x1xf32>
    %cst_50 = arith.constant 3.200000e+01 : f32
    %126 = vector.broadcast %cst_50 : f32 to vector<8x1xf32>
    %127 = arith.divf %125, %126 : vector<8x1xf32>
    %128 = arith.mulf %123, %123 : vector<8x32xf32>
    %cst_51 = arith.constant dense<0.000000e+00> : vector<8xf32>
    %129 = vector.multi_reduction <add>, %128, %cst_51 [1] : vector<8x32xf32> to vector<8xf32>
    %130 = vector.shape_cast %129 : vector<8xf32> to vector<8x1xf32>
    %cst_52 = arith.constant 3.200000e+01 : f32
    %131 = vector.broadcast %cst_52 : f32 to vector<8x1xf32>
    %132 = arith.divf %130, %131 : vector<8x1xf32>
    %133 = arith.mulf %127, %127 : vector<8x1xf32>
    %134 = arith.subf %132, %133 : vector<8x1xf32>
    %cst_53 = arith.constant 0.000000e+00 : f32
    %135 = vector.broadcast %cst_53 : f32 to vector<8x1xf32>
    %136 = arith.maximumf %134, %135 : vector<8x1xf32>
    %137 = vector.broadcast %127 : vector<8x1xf32> to vector<8x32xf32>
    %138 = arith.subf %123, %137 : vector<8x32xf32>
    %cst_54 = arith.constant 9.99999974E-6 : f32
    %139 = vector.broadcast %cst_54 : f32 to vector<8x1xf32>
    %140 = arith.addf %136, %139 : vector<8x1xf32>
    %141 = math.rsqrt %140 : vector<8x1xf32>
    %142 = vector.broadcast %141 : vector<8x1xf32> to vector<8x32xf32>
    %143 = arith.mulf %138, %142 : vector<8x32xf32>
    %144 = vector.broadcast %10 : vector<1x32xf32> to vector<8x32xf32>
    %145 = arith.mulf %143, %144 : vector<8x32xf32>
    %146 = vector.broadcast %12 : vector<1x32xf32> to vector<8x32xf32>
    %147 = arith.addf %145, %146 : vector<8x32xf32>
    %148 = arith.truncf %147 : vector<8x32xf32> to vector<8x32xbf16>
    %c0_55 = arith.constant 0 : index
    %c0_56 = arith.constant 0 : index
    %c0_57 = arith.constant 0 : index
    %149 = vector.load %arg5[%c0_55, %c0_56, %c0_57] : memref<1x32x64xbf16, #tpu.memory_space<vmem>>, vector<1x32x64xbf16>
    %150 = vector.shape_cast %149 : vector<1x32x64xbf16> to vector<32x64xbf16>
    %cst_58 = arith.constant dense<0.000000e+00> : vector<8x64xf32>
    %151 = tpu.matmul %148, %150, %cst_58 {dimension_numbers = #tpu.dot_dimension_numbers<[1], [0], [0], [1], [0, 0, 1, 1], [], []>} : vector<8x32xbf16>, vector<32x64xbf16>, vector<8x64xf32> -> vector<8x64xf32>
    %152 = vector.broadcast %14 : vector<1x64xf32> to vector<8x64xf32>
    %153 = arith.addf %151, %152 : vector<8x64xf32>
    %cst_59 = arith.constant 5.000000e-01 : f32
    %154 = vector.broadcast %cst_59 : f32 to vector<8x64xf32>
    %155 = arith.mulf %154, %153 : vector<8x64xf32>
    %cst_60 = arith.constant 0.707106769 : f32
    %156 = vector.broadcast %cst_60 : f32 to vector<8x64xf32>
    %157 = arith.mulf %153, %156 : vector<8x64xf32>
    %158 = math.erf %157 : vector<8x64xf32>
    %cst_61 = arith.constant 1.000000e+00 : f32
    %159 = vector.broadcast %cst_61 : f32 to vector<8x64xf32>
    %160 = arith.addf %159, %158 : vector<8x64xf32>
    %161 = arith.mulf %155, %160 : vector<8x64xf32>
    %162 = arith.truncf %161 : vector<8x64xf32> to vector<8x64xbf16>
    %c0_62 = arith.constant 0 : index
    %c0_63 = arith.constant 0 : index
    %c0_64 = arith.constant 0 : index
    %163 = vector.load %arg6[%c0_62, %c0_63, %c0_64] : memref<1x64x32xbf16, #tpu.memory_space<vmem>>, vector<1x64x32xbf16>
    %164 = vector.shape_cast %163 : vector<1x64x32xbf16> to vector<64x32xbf16>
    %cst_65 = arith.constant dense<0.000000e+00> : vector<8x32xf32>
    %165 = tpu.matmul %162, %164, %cst_65 {dimension_numbers = #tpu.dot_dimension_numbers<[1], [0], [0], [1], [0, 0, 1, 1], [], []>} : vector<8x64xbf16>, vector<64x32xbf16>, vector<8x32xf32> -> vector<8x32xf32>
    %166 = vector.broadcast %16 : vector<1x32xf32> to vector<8x32xf32>
    %167 = arith.addf %165, %166 : vector<8x32xf32>
    %168 = arith.addf %147, %167 : vector<8x32xf32>
    %cst_66 = arith.constant dense<0.000000e+00> : vector<8xf32>
    %169 = vector.multi_reduction <add>, %168, %cst_66 [1] : vector<8x32xf32> to vector<8xf32>
    %170 = vector.shape_cast %169 : vector<8xf32> to vector<8x1xf32>
    %cst_67 = arith.constant 3.200000e+01 : f32
    %171 = vector.broadcast %cst_67 : f32 to vector<8x1xf32>
    %172 = arith.divf %170, %171 : vector<8x1xf32>
    %173 = arith.mulf %168, %168 : vector<8x32xf32>
    %cst_68 = arith.constant dense<0.000000e+00> : vector<8xf32>
    %174 = vector.multi_reduction <add>, %173, %cst_68 [1] : vector<8x32xf32> to vector<8xf32>
    %175 = vector.shape_cast %174 : vector<8xf32> to vector<8x1xf32>
    %cst_69 = arith.constant 3.200000e+01 : f32
    %176 = vector.broadcast %cst_69 : f32 to vector<8x1xf32>
    %177 = arith.divf %175, %176 : vector<8x1xf32>
    %178 = arith.mulf %172, %172 : vector<8x1xf32>
    %179 = arith.subf %177, %178 : vector<8x1xf32>
    %cst_70 = arith.constant 0.000000e+00 : f32
    %180 = vector.broadcast %cst_70 : f32 to vector<8x1xf32>
    %181 = arith.maximumf %179, %180 : vector<8x1xf32>
    %182 = vector.broadcast %172 : vector<8x1xf32> to vector<8x32xf32>
    %183 = arith.subf %168, %182 : vector<8x32xf32>
    %cst_71 = arith.constant 9.99999974E-6 : f32
    %184 = vector.broadcast %cst_71 : f32 to vector<8x1xf32>
    %185 = arith.addf %181, %184 : vector<8x1xf32>
    %186 = math.rsqrt %185 : vector<8x1xf32>
    %187 = vector.broadcast %186 : vector<8x1xf32> to vector<8x32xf32>
    %188 = arith.mulf %183, %187 : vector<8x32xf32>
    %189 = vector.broadcast %18 : vector<1x32xf32> to vector<8x32xf32>
    %190 = arith.mulf %188, %189 : vector<8x32xf32>
    %191 = vector.broadcast %20 : vector<1x32xf32> to vector<8x32xf32>
    %192 = arith.addf %190, %191 : vector<8x32xf32>
    %c0_72 = arith.constant 0 : index
    %c0_73 = arith.constant 0 : index
    %193 = vector.load %arg8[%c0_72, %c0_73] : memref<8x32xf32, #tpu.memory_space<vmem>>, vector<8x32xf32>
    tpu.vector_store %arg8[%c0_72, %c0_73], %192 {strides = array<i32>} : memref<8x32xf32, #tpu.memory_space<vmem>>, vector<8x32xf32>,
    return
  }
  func.func @transform_1(%arg0: i32, %arg1: i32) -> (i32, i32, i32) {
    %c0_i32 = arith.constant 0 : i32
    %c0_i32_0 = arith.constant 0 : i32
    %c0_i32_1 = arith.constant 0 : i32
    return %arg1, %c0_i32, %c0_i32_0 : i32, i32, i32
  }
  func.func @transform_2(%arg0: i32, %arg1: i32) -> (i32, i32, i32) {
    %c0_i32 = arith.constant 0 : i32
    %c0_i32_0 = arith.constant 0 : i32
    %c0_i32_1 = arith.constant 0 : i32
    return %arg1, %c0_i32, %c0_i32_0 : i32, i32, i32
  }
  func.func @transform_3(%arg0: i32, %arg1: i32) -> (i32, i32, i32) {
    %c0_i32 = arith.constant 0 : i32
    %c0_i32_0 = arith.constant 0 : i32
    %c0_i32_1 = arith.constant 0 : i32
    return %arg1, %c0_i32, %c0_i32_0 : i32, i32, i32
  }
  func.func @transform_4(%arg0: i32, %arg1: i32) -> (i32, i32, i32) {
    %c0_i32 = arith.constant 0 : i32
    %c0_i32_0 = arith.constant 0 : i32
    %c0_i32_1 = arith.constant 0 : i32
    return %arg1, %c0_i32, %c0_i32_0 : i32, i32, i32
  }
  func.func @transform_5(%arg0: i32, %arg1: i32) -> (i32, i32, i32) {
    %c0_i32 = arith.constant 0 : i32
    %c0_i32_0 = arith.constant 0 : i32
    %c0_i32_1 = arith.constant 0 : i32
    return %arg1, %c0_i32, %c0_i32_0 : i32, i32, i32
  }
  func.func @transform_6(%arg0: i32, %arg1: i32) -> (i32, i32) {
    %c0_i32 = arith.constant 0 : i32
    %c0_i32_0 = arith.constant 0 : i32
    return %arg0, %c0_i32 : i32, i32
  }
}

</mosaic_0001>

<llo_original>
// kernel: tpu_custom_call.1
$region0: #{tpu_custom_call.1}
  #allocation0 [shape = 'u32[]', space=smem, size = 0x4, offset = 0x4, fixed_abs, tag = 'smem constant byte address 0x4 - core index']
  #allocation1 [shape = 'u32[144,128]{1,0:T(1,128)}', space=vmem, size = 0x12000, scoped, tag = 'internal scratch']
  #allocation2 [shape = 'f32[8,32]{1,0:T(8,128)}', space=vmem, size = 0x1000, scoped, tag = 'scratch operand']
  #allocation3 [shape = 's32[1]{0}', space=sflag, size = 0x4, scoped, tag = 'scratch operand']
  #allocation8 [shape = 's32[]', space=sflag, size = 0x4, offset = 0, fixed_abs, tag = 'sflag constant byte address 0x0 - dummy sync flag']
  #allocation9 [shape = 's32[]', space=sflag, size = 0x4, offset = 0, fixed_abs, tag = 'sflag constant byte address 0x0 - dummy sync flag']
  #allocation10 [shape = 'u32[]', space=smem, size = 0x4, offset = 0x44, fixed_abs, tag = 'smem constant byte address 0x44 - assertion arg 0']
  #allocation11 [shape = 'u32[]', space=smem, size = 0x4, offset = 0x48, fixed_abs, tag = 'smem constant byte address 0x48 - assertion arg 1']
  %s0 = inlined_call_operand.hbm [shape: f32[16,32], index: 0, kind: input, shape index: {}]
  %s1 = inlined_call_operand.vmem [shape: bf16[2,32,96], index: 1, kind: input, shape index: {}]
  %s2 = inlined_call_operand.vmem [shape: bf16[2,32,32], index: 2, kind: input, shape index: {}]
  %s3 = inlined_call_operand.vmem [shape: bf16[2,32,64], index: 3, kind: input, shape index: {}]
  %s4 = inlined_call_operand.vmem [shape: bf16[2,64,32], index: 4, kind: input, shape index: {}]
  %s5 = inlined_call_operand.hbm [shape: f32[2,8,96], index: 5, kind: input, shape index: {}]
  %s6 = inlined_call_operand.hbm [shape: f32[16,32], index: 6, kind: output, shape index: {}]
  %s7 = sld [smem:[#allocation0]]
  $region65: #{tpu_custom_call.1} parent=0
    _
  %s9 = ssub.s32 1, %s7
  %s10 = scalar_select 0, %s9, %s7
  $region1: #{tpu_custom_call.1} parent=0
    #allocation4 [shape = 'u8[8192]{0}', space=vmem, size = 0x2000, scoped, tag = 'input window, operand 5']
    #allocation5 [shape = 's32[2]{0}', space=sflag, size = 0x8, scoped, tag = 'scoped memory for tpu_custom_call.1']
    #allocation6 [shape = 's32[2]{0}', space=sflag, size = 0x8, scoped, tag = 'scoped memory for tpu_custom_call.1']
    #allocation7 [shape = 'u8[8192]{0}', space=vmem, size = 0x2000, scoped, tag = 'output window, operand 0']
    %11 = vsyncpa [#allocation5], 0
    %s12 = scalar_lea.sflag [#allocation5], 1
    %13 = vsyncpa %s12, 0
    %14 = vsyncpa [#allocation6], 0
    %s15 = scalar_lea.sflag [#allocation6], 1
    %16 = vsyncpa %s15, 0
    loop: start=0, step=1, limit=6
    $region2: #{tpu_custom_call.1} parent=1 // loop_pre_header
      _
    $region3: #{tpu_custom_call.1} parent=1 // loop_header
      %s18 = sphi 0, %s22
      %p19 = scmp.ge.s32.totalorder %s18, 6
      %s25 = sphi 0, %s37
      %s26 = sphi 0, %s33
      %s27 = sphi 0, %s25
      %s28 = sphi 0, %s26
      %s29 = sphi 0, %s27
      %s30 = sphi 0, %s28
      %s40 = sphi 0, %s42
      %s43 = sphi 0, %s40
      %s44 = sphi 0, %s43
      %s60 = sphi 0, %s44
      %s66 = sphi 0, %s68
      %s69 = sphi 0, %s66
      %s70 = sphi 0, %s69
      %s86 = sphi 0, %s70
      %s92 = sphi 0, %s94
      %s95 = sphi 0, %s92
      %s96 = sphi 0, %s95
      %s112 = sphi 0, %s96
      %s118 = sphi 0, %s120
      %s121 = sphi 0, %s118
      %s122 = sphi 0, %s121
      %s138 = sphi 0, %s122
      %s144 = sphi 0, %s146
      %s147 = sphi 0, %s144
      %s148 = sphi 0, %s147
      %s164 = sphi 0, %s148
      %s170 = sphi 0, %s172
      %s173 = sphi 0, %s170
      %s174 = sphi 0, %s173
      %s190 = sphi 0, %s174
    $region4: #{tpu_custom_call.1} parent=1 // loop_header_branch
      %21 = sbr.rel (%p19) target = $region8
    $region5: #{tpu_custom_call.1} parent=1 // loop_body
      %s23 = ssub.s32 %s18, 1
      %s24 = ssub.s32 %s18, 2
      %s31 = sadd.s32 1, %s26
      %p32 = scmp.ge.s32.totalorder %s31, 2
      %s33 = scalar_select %p32, 0, %s31
      %s34 = sadd.s32 1, %s25
      %s35 = scalar_select %p32, %s34, %s25
      %p36 = scmp.ge.s32.totalorder %s35, 2
      %s37 = scalar_select %p36, 0, %s35
      %s38 = ssub.s32 %s26, %s33
      %p39 = scmp.eq.s32.totalorder %s38, 0
      %s41 = sadd.s32 %s40, 1
      %s42 = scalar_select %p39, %s40, %s41
      %p45 = pneg %p39
      %p46 = scmp.eq.s32.totalorder %s18, 3
      %p47 = por %p45, %p46
      %p48 = scmp.ne.s32.totalorder %s40, %s43
      %p49 = scmp.eq.s32.totalorder %s18, 0
      %p50 = por %p48, %p49
      %p51 = scmp.ne.s32.totalorder %s40, %s43
      %p52 = scmp.eq.s32.totalorder %s23, 3
      %p53 = por %p51, %p52
      %p54 = scmp.ne.s32.totalorder %s43, %s44
      %p55 = scmp.eq.s32.totalorder %s23, 0
      %p56 = por %p54, %p55
      %p57 = scmp.ne.s32.totalorder %s43, %s44
      %p58 = scmp.eq.s32.totalorder %s24, 3
      %p59 = por %p57, %p58
      %p61 = scmp.ne.s32.totalorder %s44, %s60
      %p62 = scmp.eq.s32.totalorder %s24, 0
      %p63 = por %p61, %p62
      %s64 = ssub.s32 %s26, %s33
      %p65 = scmp.eq.s32.totalorder %s64, 0
      %s67 = sadd.s32 %s66, 1
      %s68 = scalar_select %p65, %s66, %s67
      %p71 = pneg %p65
      %p72 = scmp.eq.s32.totalorder %s18, 3
      %p73 = por %p71, %p72
      %p74 = scmp.ne.s32.totalorder %s66, %s69
      %p75 = scmp.eq.s32.totalorder %s18, 0
      %p76 = por %p74, %p75
      %p77 = scmp.ne.s32.totalorder %s66, %s69
      %p78 = scmp.eq.s32.totalorder %s23, 3
      %p79 = por %p77, %p78
      %p80 = scmp.ne.s32.totalorder %s69, %s70
      %p81 = scmp.eq.s32.totalorder %s23, 0
      %p82 = por %p80, %p81
      %p83 = scmp.ne.s32.totalorder %s69, %s70
      %p84 = scmp.eq.s32.totalorder %s24, 3
      %p85 = por %p83, %p84
      %p87 = scmp.ne.s32.totalorder %s70, %s86
      %p88 = scmp.eq.s32.totalorder %s24, 0
      %p89 = por %p87, %p88
      %s90 = ssub.s32 %s26, %s33
      %p91 = scmp.eq.s32.totalorder %s90, 0
      %s93 = sadd.s32 %s92, 1
      %s94 = scalar_select %p91, %s92, %s93
      %p97 = pneg %p91
      %p98 = scmp.eq.s32.totalorder %s18, 3
      %p99 = por %p97, %p98
      %p100 = scmp.ne.s32.totalorder %s92, %s95
      %p101 = scmp.eq.s32.totalorder %s18, 0
      %p102 = por %p100, %p101
      %p103 = scmp.ne.s32.totalorder %s92, %s95
      %p104 = scmp.eq.s32.totalorder %s23, 3
      %p105 = por %p103, %p104
      %p106 = scmp.ne.s32.totalorder %s95, %s96
      %p107 = scmp.eq.s32.totalorder %s23, 0
      %p108 = por %p106, %p107
      %p109 = scmp.ne.s32.totalorder %s95, %s96
      %p110 = scmp.eq.s32.totalorder %s24, 3
      %p111 = por %p109, %p110
      %p113 = scmp.ne.s32.totalorder %s96, %s112
      %p114 = scmp.eq.s32.totalorder %s24, 0
      %p115 = por %p113, %p114
      %s116 = ssub.s32 %s26, %s33
      %p117 = scmp.eq.s32.totalorder %s116, 0
      %s119 = sadd.s32 %s118, 1
      %s120 = scalar_select %p117, %s118, %s119
      %p123 = pneg %p117
      %p124 = scmp.eq.s32.totalorder %s18, 3
      %p125 = por %p123, %p124
      %p126 = scmp.ne.s32.totalorder %s118, %s121
      %p127 = scmp.eq.s32.totalorder %s18, 0
      %p128 = por %p126, %p127
      %p129 = scmp.ne.s32.totalorder %s118, %s121
      %p130 = scmp.eq.s32.totalorder %s23, 3
      %p131 = por %p129, %p130
      %p132 = scmp.ne.s32.totalorder %s121, %s122
      %p133 = scmp.eq.s32.totalorder %s23, 0
      %p134 = por %p132, %p133
      %p135 = scmp.ne.s32.totalorder %s121, %s122
      %p136 = scmp.eq.s32.totalorder %s24, 3
      %p137 = por %p135, %p136
      %p139 = scmp.ne.s32.totalorder %s122, %s138
      %p140 = scmp.eq.s32.totalorder %s24, 0
      %p141 = por %p139, %p140
      %s142 = ssub.s32 %s26, %s33
      %p143 = scmp.eq.s32.totalorder %s142, 0
      %s145 = sadd.s32 %s144, 1
      %s146 = scalar_select %p143, %s144, %s145
      %p149 = pneg %p143
      %p150 = scmp.eq.s32.totalorder %s18, 3
      %p151 = por %p149, %p150
      %p152 = scmp.ne.s32.totalorder %s144, %s147
      %p153 = scmp.eq.s32.totalorder %s18, 0
      %p154 = por %p152, %p153
      %p155 = scmp.ne.s32.totalorder %s144, %s147
      %p156 = scmp.eq.s32.totalorder %s23, 3
      %p157 = por %p155, %p156
      %p158 = scmp.ne.s32.totalorder %s147, %s148
      %p159 = scmp.eq.s32.totalorder %s23, 0
      %p160 = por %p158, %p159
      %p161 = scmp.ne.s32.totalorder %s147, %s148
      %p162 = scmp.eq.s32.totalorder %s24, 3
      %p163 = por %p161, %p162
      %p165 = scmp.ne.s32.totalorder %s148, %s164
      %p166 = scmp.eq.s32.totalorder %s24, 0
      %p167 = por %p165, %p166
      %s168 = ssub.s32 %s25, %s37
      %p169 = scmp.eq.s32.totalorder %s168, 0
      %s171 = sadd.s32 %s170, 1
      %s172 = scalar_select %p169, %s170, %s171
      %p175 = pneg %p169
      %p176 = scmp.eq.s32.totalorder %s18, 3
      %p177 = por %p175, %p176
      %p178 = scmp.ne.s32.totalorder %s170, %s173
      %p179 = scmp.eq.s32.totalorder %s18, 0
      %p180 = por %p178, %p179
      %p181 = scmp.ne.s32.totalorder %s170, %s173
      %p182 = scmp.eq.s32.totalorder %s23, 3
      %p183 = por %p181, %p182
      %p184 = scmp.ne.s32.totalorder %s173, %s174
      %p185 = scmp.eq.s32.totalorder %s23, 0
      %p186 = por %p184, %p185
      %p187 = scmp.ne.s32.totalorder %s173, %s174
      %p188 = scmp.eq.s32.totalorder %s24, 3
      %p189 = por %p187, %p188
      %p191 = scmp.ne.s32.totalorder %s174, %s190
      %p192 = scmp.eq.s32.totalorder %s24, 0
      %p193 = por %p191, %p192
      %p194 = scmp.le.s32.totalorder 1, %s18
      %p195 = scmp.lt.s32.totalorder %s18, 5
      %p196 = pnand %p194, %p195
      %p197 = pneg %p196
      // Predicated region
      $region9: #{tpu_custom_call.1} parent=5 // pred_check
        _
      $region10: #{tpu_custom_call.1} parent=5 // pred_check_branch
        %199 = sbr.rel (%p196) target = $region12
      $region11: #{tpu_custom_call.1} parent=5 // pred_region
        %s200 = ssub.s32 %s18, 1
      $region12: #{tpu_custom_call.1} parent=5 // pred_fallthru
        _
      %p201 = scmp.lt.s32.totalorder %s18, 4
      // Predicated region
      $region13: #{tpu_custom_call.1} parent=5 // pred_check
        %p202 = pneg %p201
      $region14: #{tpu_custom_call.1} parent=5 // pred_check_branch
        %204 = sbr.rel (%p202) target = $region16
      $region15: #{tpu_custom_call.1} parent=5 // pred_region
        // Predicated region
        $region17: #{tpu_custom_call.1} parent=15 // pred_check
          %p205 = pneg %p50
        $region18: #{tpu_custom_call.1} parent=15 // pred_check_branch
          %207 = sbr.rel (%p205) target = $region20
        $region19: #{tpu_custom_call.1} parent=15 // pred_region
          %p208 = scmp.lt.s32.totalorder %s26, 1
          %s209 = scalar_select %p208, %s26, 1
          %s210 = smul.addr %s209, 4
          %s211 = smul.addr %s210, 4
          %s212 = scalar_lea.vmem %s1, %s211
        $region20: #{tpu_custom_call.1} parent=15 // pred_fallthru
          _
        // Predicated region
        $region21: #{tpu_custom_call.1} parent=15 // pred_check
          %p213 = pneg %p76
        $region22: #{tpu_custom_call.1} parent=15 // pred_check_branch
          %215 = sbr.rel (%p213) target = $region24
        $region23: #{tpu_custom_call.1} parent=15 // pred_region
          %p216 = scmp.lt.s32.totalorder %s26, 1
          %s217 = scalar_select %p216, %s26, 1
          %s218 = smul.addr %s217, 4
          %s219 = smul.addr %s218, 4
          %s220 = scalar_lea.vmem %s2, %s219
        $region24: #{tpu_custom_call.1} parent=15 // pred_fallthru
          _
        // Predicated region
        $region25: #{tpu_custom_call.1} parent=15 // pred_check
          %p221 = pneg %p102
        $region26: #{tpu_custom_call.1} parent=15 // pred_check_branch
          %223 = sbr.rel (%p221) target = $region28
        $region27: #{tpu_custom_call.1} parent=15 // pred_region
          %p224 = scmp.lt.s32.totalorder %s26, 1
          %s225 = scalar_select %p224, %s26, 1
          %s226 = smul.addr %s225, 4
          %s227 = smul.addr %s226, 4
          %s228 = scalar_lea.vmem %s3, %s227
        $region28: #{tpu_custom_call.1} parent=15 // pred_fallthru
          _
        // Predicated region
        $region29: #{tpu_custom_call.1} parent=15 // pred_check
          %p229 = pneg %p128
        $region30: #{tpu_custom_call.1} parent=15 // pred_check_branch
          %231 = sbr.rel (%p229) target = $region32
        $region31: #{tpu_custom_call.1} parent=15 // pred_region
          %p232 = scmp.lt.s32.totalorder %s26, 1
          %s233 = scalar_select %p232, %s26, 1
          %s234 = smul.addr %s233, 8
          %s235 = smul.addr %s234, 4
          %s236 = scalar_lea.vmem %s4, %s235
        $region32: #{tpu_custom_call.1} parent=15 // pred_fallthru
          _
        // Predicated region
        $region33: #{tpu_custom_call.1} parent=15 // pred_check
          %p237 = pneg %p154
        $region34: #{tpu_custom_call.1} parent=15 // pred_check_branch
          %239 = sbr.rel (%p237) target = $region36
        $region35: #{tpu_custom_call.1} parent=15 // pred_region
          %s240 = sand.u32 %s144, 1
          %s241 = scalar_lea.sflag [#allocation5], %s240
          %s242 = sand.u32 %s144, 1
          %s243 = smul.addr %s242, 8
          %s244 = scalar_lea.vmem [#allocation4], %s243
          %s246 = ssub.s32 128, 128
          %247 = vsyncadd %s241, %s246
          %s248 = smul.addr %s26, 128
          %s249 = scalar_lea.hbm %s5, %s248
          %s251 = sshll.u32 %s244, 4
          %s252 = int_to_ptr.vmem [resolvable:$true] %s251
          %254 = dma.hbm_to_vmem [thread:$0]  %s249, 128, %s252, %s241
        $region36: #{tpu_custom_call.1} parent=15 // pred_fallthru
          _
      $region16: #{tpu_custom_call.1} parent=5 // pred_fallthru
        _
      %p255 = scmp.le.s32.totalorder 1, %s18
      %p256 = scmp.lt.s32.totalorder %s18, 5
      %p257 = pnand %p255, %p256
      %p258 = pneg %p257
      // Predicated region
      $region37: #{tpu_custom_call.1} parent=5 // pred_check
        _
      $region38: #{tpu_custom_call.1} parent=5 // pred_check_branch
        %260 = sbr.rel (%p257) target = $region40
      $region39: #{tpu_custom_call.1} parent=5 // pred_region
        %s261 = ssub.s32 %s18, 1
        %s262 = sand.u32 %s147, 1
        %s263 = scalar_lea.sflag [#allocation5], %s262
        %s264 = sand.u32 %s147, 1
        %s265 = smul.addr %s264, 8
        %s266 = scalar_lea.vmem [#allocation4], %s265
        // Predicated region
        $region41: #{tpu_custom_call.1} parent=39 // pred_check
          %p267 = pneg %p160
        $region42: #{tpu_custom_call.1} parent=39 // pred_check_branch
          %269 = sbr.rel (%p267) target = $region44
        $region43: #{tpu_custom_call.1} parent=39 // pred_region
          %270 = dma.done %s263, 128
        $region44: #{tpu_custom_call.1} parent=39 // pred_fallthru
          _
        %p271 = scmp.lt.s32.totalorder %s28, 1
        %s272 = scalar_select %p271, %s28, 1
        %s273 = smul.addr %s272, 4
        %s274 = smul.addr %s273, 4
        %s275 = scalar_lea.vmem %s1, %s274
        %p276 = pneg %p56
        %p277 = pneg %p53
        %p278 = scmp.lt.s32.totalorder %s28, 1
        %s279 = scalar_select %p278, %s28, 1
        %s280 = smul.addr %s279, 4
        %s281 = smul.addr %s280, 4
        %s282 = scalar_lea.vmem %s2, %s281
        %p283 = pneg %p82
        %p284 = pneg %p79
        %p285 = scmp.lt.s32.totalorder %s28, 1
        %s286 = scalar_select %p285, %s28, 1
        %s287 = smul.addr %s286, 4
        %s288 = smul.addr %s287, 4
        %s289 = scalar_lea.vmem %s3, %s288
        %p290 = pneg %p108
        %p291 = pneg %p105
        %p292 = scmp.lt.s32.totalorder %s28, 1
        %s293 = scalar_select %p292, %s28, 1
        %s294 = smul.addr %s293, 8
        %s295 = smul.addr %s294, 4
        %s296 = scalar_lea.vmem %s4, %s295
        %p297 = pneg %p134
        %p298 = pneg %p131
        %s299 = sand.u32 %s147, 1
        %s300 = scalar_lea.sflag [#allocation5], %s299
        %s301 = sand.u32 %s147, 1
        %s302 = smul.addr %s301, 8
        %s303 = scalar_lea.vmem [#allocation4], %s302
        %p304 = pneg %p160
        %p305 = pneg %p157
        %p306 = pneg %p186
        %p307 = pneg %p183
        %s308 = sand.u32 %s173, 1
        %s309 = scalar_lea.sflag [#allocation6], %s308
        %s310 = sand.u32 %s173, 1
        %s311 = smul.addr %s310, 8
        %s312 = scalar_lea.vmem [#allocation7], %s311
        %p313 = scmp.lt.s32.totalorder %s28, 1
        %s314 = scalar_select %p313, %s28, 1
        %s315 = smul.addr %s314, 4
        %s316 = smul.addr %s315, 4
        %s317 = scalar_lea.vmem %s1, %s316
        %p318 = scmp.lt.s32.totalorder %s28, 1
        %s319 = scalar_select %p318, %s28, 1
        %s320 = smul.addr %s319, 4
        %s321 = smul.addr %s320, 4
        %s322 = scalar_lea.vmem %s2, %s321
        %p323 = scmp.lt.s32.totalorder %s28, 1
        %s324 = scalar_select %p323, %s28, 1
        %s325 = smul.addr %s324, 4
        %s326 = smul.addr %s325, 4
        %s327 = scalar_lea.vmem %s3, %s326
        %p328 = scmp.lt.s32.totalorder %s28, 1
        %s329 = scalar_select %p328, %s28, 1
        %s330 = smul.addr %s329, 8
        %s331 = smul.addr %s330, 4
        %s332 = scalar_lea.vmem %s4, %s331
        %p334 = scmp.eq.s32.totalorder %s28, 0
        // Predicated region
        $region45: #{tpu_custom_call.1} parent=39 // pred_check
          %p335 = pneg %p334
        $region46: #{tpu_custom_call.1} parent=39 // pred_check_branch
          %337 = sbr.rel (%p335) target = $region48
        $region47: #{tpu_custom_call.1} parent=39 // pred_region
          %s338 = smul.u32 %s27, 8
          %s339 = smul.addr %s338, 16
          %s340 = scalar_lea.hbm %s0, %s339
          // Predicated region
          $region49: #{tpu_custom_call.1} parent=47 // pred_check
            _
          $region50: #{tpu_custom_call.1} parent=47 // pred_check_branch
            %342 = sbr.rel target = $region52
          $region51: #{tpu_custom_call.1} parent=47 // pred_region
            %343 = sst [smem:[#allocation10]] [#allocation9]
            %344 = sst [smem:[#allocation11]] [#allocation8]
          $region52: #{tpu_custom_call.1} parent=47 // pred_fallthru
            _
          %346 = shalt.err (0)
          %s348 = sshll.u32 %s312, 4
          %s349 = int_to_ptr.vmem [resolvable:$true] %s348
          %351 = dma.hbm_to_vmem [thread:$0]  %s340, 128, %s349, [#allocation3]
          %s352 = smul.u32 8, 1
          %s353 = sshll.u32 %s352, 4
          %354 = dma.done [#allocation3], %s353
        $region48: #{tpu_custom_call.1} parent=39 // pred_fallthru
          _
        %v355 = vld [vmem:[%s312] sm:$0xff]
        %v356 = vpack.c.bf16 %v355, %v355
        %v357 = vld [vmem:[%s266] sm:$0x1]
        %v358 = vld [vmem:[%s266 + $0x1] sm:$0x1]
        %v359 = vld [vmem:[%s266 + $0x2] sm:$0x1]
        %v360 = vld [vmem:[%s266 + $0x3] sm:$0x1]
        %v361 = vld [vmem:[%s266 + $0x4] sm:$0x1]
        %v362 = vld [vmem:[%s266 + $0x5] sm:$0x1]
        %v363 = vld [vmem:[%s266 + $0x6] sm:$0x1]
        %v364 = vld [vmem:[%s266 + $0x7] sm:$0x1]
        %v365 = vld [vmem:[%s317] sm:$0xf]
        %v366 = vld [vmem:[%s317 + $0x4] sm:$0xf]
        %v367 = vld [vmem:[%s317 + $0x8] sm:$0xf]
        %v368 = vld [vmem:[%s317 + $0xc] sm:$0xf]
        %v369 = vlaneseq
        %v370 = vshrl.u32 %v369, 7
        %v371 = vsub.s32 0, %v370
        %v372 = vrot.slane %v357, %v371
        %v377 = vunpack.c.l.b16 %v365
        %v378 = vunpack.c.l.b16 %v366
        %v379 = vunpack.c.l.b16 %v367
        %v380 = vunpack.c.l.b16 %v368
        %v381 = vpack.c.b16 %v378, %v377
        %v382 = vpack.c.b16 %v380, %v379
        %vm385 = vcmask 261120
        %v387 = vsel %vm385, %v356, 0
        %389 = vmatprep.subr.bf16.mxu0 0
        %390 = vmatpush1.bf16.msra.mxu0 0
        %391 = vmatprep.subr.bf16.mxu0 0
        %392 = vmatpush1.bf16.msra.mxu0 0
        %393 = vmatprep.subr.bf16.mxu0 0
        %394 = vmatpush1.bf16.msra.mxu0 0
        %395 = vmatprep.subr.bf16.mxu0 0
        %396 = vmatpush1.bf16.msra.mxu0 0
        %397 = vmatprep.subr.bf16.mxu0 0
        %398 = vmatpush1.bf16.msra.mxu0 0
        %399 = vmatprep.subr.bf16.mxu0 0
        %400 = vmatpush1.bf16.msra.mxu0 0
        %401 = vmatprep.subr.bf16.mxu0 0
        %402 = vmatpush1.bf16.msra.mxu0 %v382
        %403 = vmatprep.subr.bf16.mxu0 0
        %404 = vmatpush1.bf16.msra.mxu0 %v381
        %405 = vmatprep.subr.bf16.mxu0 0
        %406 = vmatpush2.bf16.msra.mxu0 0
        %407 = vmatprep.subr.bf16.mxu0 0
        %408 = vmatpush2.bf16.msra.mxu0 0
        %409 = vmatprep.subr.bf16.mxu0 0
        %410 = vmatpush2.bf16.msra.mxu0 0
        %411 = vmatprep.subr.bf16.mxu0 0
        %412 = vmatpush2.bf16.msra.mxu0 0
        %413 = vmatprep.subr.bf16.mxu0 0
        %414 = vmatpush2.bf16.msra.mxu0 0
        %415 = vmatprep.subr.bf16.mxu0 0
        %416 = vmatpush2.bf16.msra.mxu0 0
        %417 = vmatprep.subr.bf16.mxu0 0
        %418 = vmatpush2.bf16.msra.mxu0 0
        %419 = vmatprep.subr.bf16.mxu0 0
        %420 = vmatpush2.bf16.msra.mxu0 0
        %421 = vmatprep.mubr.bf16.mxu0 0
        %422 = vmatmul.mubr.bf16.gmra.mxu0 %v387
        %v423 = vpop.f32.mrf.mxu0
        %v424 = vadd.f32 %v372, %v423
        %v425 = vpop.f32.mrf.mxu0
        %v426 = vpop.f32.mrf.mxu0
        %v427 = vpop.f32.mrf.mxu0
        %428 = vdwg.mxu0
        %v429 = vpack.c.bf16 %v424, %v424
        %431 = vrot.lane.b32.xlu0 %v429, 96
        %v432 = vpop.permute.xlu0 %431
        %vm433 = vcmask 64512
        %v435 = vsel %vm433, %v429, 0
        %v438 = vsel %vm433, %v432, 0
        %440 = vmatprep.subr.bf16.mxu0 0
        %441 = vmatpush1.bf16.xpose.msra.mxu0 0
        %442 = vmatprep.subr.bf16.mxu0 0
        %443 = vmatpush1.bf16.xpose.msra.mxu0 0
        %444 = vmatprep.subr.bf16.mxu0 0
        %445 = vmatpush1.bf16.xpose.msra.mxu0 0
        %446 = vmatprep.subr.bf16.mxu0 0
        %447 = vmatpush1.bf16.xpose.msra.mxu0 0
        %448 = vmatprep.subr.bf16.mxu0 0
        %449 = vmatpush1.bf16.xpose.msra.mxu0 0
        %450 = vmatprep.subr.bf16.mxu0 0
        %451 = vmatpush1.bf16.xpose.msra.mxu0 0
        %452 = vmatprep.subr.bf16.mxu0 0
        %453 = vmatpush1.bf16.xpose.msra.mxu0 0
        %454 = vmatprep.subr.bf16.mxu0 0
        %455 = vmatpush1.bf16.xpose.msra.mxu0 %v438
        %456 = vmatprep.subr.bf16.mxu0 0
        %457 = vmatpush2.bf16.xpose.msra.mxu0 0
        %458 = vmatprep.subr.bf16.mxu0 0
        %459 = vmatpush2.bf16.xpose.msra.mxu0 0
        %460 = vmatprep.subr.bf16.mxu0 0
        %461 = vmatpush2.bf16.xpose.msra.mxu0 0
        %462 = vmatprep.subr.bf16.mxu0 0
        %463 = vmatpush2.bf16.xpose.msra.mxu0 0
        %464 = vmatprep.subr.bf16.mxu0 0
        %465 = vmatpush2.bf16.xpose.msra.mxu0 0
        %466 = vmatprep.subr.bf16.mxu0 0
        %467 = vmatpush2.bf16.xpose.msra.mxu0 0
        %468 = vmatprep.subr.bf16.mxu0 0
        %469 = vmatpush2.bf16.xpose.msra.mxu0 0
        %470 = vmatprep.subr.bf16.mxu0 0
        %471 = vmatpush2.bf16.xpose.msra.mxu0 0
        %472 = vmatprep.mubr.bf16.mxu0 0
        %473 = vmatmul.mubr.bf16.gmra.mxu0 %v435
        %v474 = vpop.f32.mrf.mxu0
        %v475 = vadd.f32 0.0, %v474
        %v476 = vpop.f32.mrf.mxu0
        %v477 = vpop.f32.mrf.mxu0
        %v478 = vpop.f32.mrf.mxu0
        %479 = vdwg.mxu0
        %v480 = vsel %vm433, %v475, -inf
        %481 = vmax.xlane.f32.xlu0 %v480
        %v482 = vpop.xlane.xlu0 %481
        %v483 = vsub.f32 %v475, %v482
        %v484 = vmul.f32 %v483, 1.442695
        %v485 = vpow.pop %v484
        %v486 = vsel %vm433, %v485, 0.0
        %487 = vadd.xlane.f32.xlu0 %v486
        %v488 = vpop.xlane.xlu0 %487
        %v489 = vrcp.pop %v488
        %v490 = vmul.f32 %v485, %v489
        %v491 = vpack.c.bf16 %v490, %v490
        %492 = vrot.lane.b32.xlu0 %v429, 64
        %v493 = vpop.permute.xlu0 %492
        %v495 = vsel %vm433, %v491, 0
        %vm497 = vcmask 1043456
        %v499 = vsel %vm497, %v493, 0
        %501 = vmatprep.subr.bf16.mxu0 0
        %502 = vmatpush1.bf16.msra.mxu0 0
        %503 = vmatprep.subr.bf16.mxu0 0
        %504 = vmatpush1.bf16.msra.mxu0 0
        %505 = vmatprep.subr.bf16.mxu0 0
        %506 = vmatpush1.bf16.msra.mxu0 0
        %507 = vmatprep.subr.bf16.mxu0 0
        %508 = vmatpush1.bf16.msra.mxu0 0
        %509 = vmatprep.subr.bf16.mxu0 0
        %510 = vmatpush1.bf16.msra.mxu0 0
        %511 = vmatprep.subr.bf16.mxu0 0
        %512 = vmatpush1.bf16.msra.mxu0 0
        %513 = vmatprep.subr.bf16.mxu0 0
        %514 = vmatpush1.bf16.msra.mxu0 0
        %515 = vmatprep.subr.bf16.mxu0 0
        %516 = vmatpush1.bf16.msra.mxu0 %v499
        %517 = vmatprep.subr.bf16.mxu0 0
        %518 = vmatpush2.bf16.msra.mxu0 0
        %519 = vmatprep.subr.bf16.mxu0 0
        %520 = vmatpush2.bf16.msra.mxu0 0
        %521 = vmatprep.subr.bf16.mxu0 0
        %522 = vmatpush2.bf16.msra.mxu0 0
        %523 = vmatprep.subr.bf16.mxu0 0
        %524 = vmatpush2.bf16.msra.mxu0 0
        %525 = vmatprep.subr.bf16.mxu0 0
        %526 = vmatpush2.bf16.msra.mxu0 0
        %527 = vmatprep.subr.bf16.mxu0 0
        %528 = vmatpush2.bf16.msra.mxu0 0
        %529 = vmatprep.subr.bf16.mxu0 0
        %530 = vmatpush2.bf16.msra.mxu0 0
        %531 = vmatprep.subr.bf16.mxu0 0
        %532 = vmatpush2.bf16.msra.mxu0 0
        %533 = vmatprep.mubr.bf16.mxu0 0
        %534 = vmatmul.mubr.bf16.gmra.mxu0 %v495
        %v535 = vpop.f32.mrf.mxu0
        %v536 = vadd.f32 0.0, %v535
        %v537 = vpop.f32.mrf.mxu0
        %v538 = vpop.f32.mrf.mxu0
        %v539 = vpop.f32.mrf.mxu0
        %540 = vdwg.mxu0
        %541 = vst.msk [vmem:[#allocation2] sm:$0xff] %vm433, %v536
        %542 = vrot.lane.b32.xlu0 %v429, 120
        %v543 = vpop.permute.xlu0 %542
        %544 = vrot.lane.b32.xlu0 %v429, 88
        %v545 = vpop.permute.xlu0 %544
        %v547 = vsel %vm433, %v543, 0
        %v550 = vsel %vm433, %v545, 0
        %552 = vmatprep.subr.bf16.mxu0 0
        %553 = vmatpush1.bf16.xpose.msra.mxu0 0
        %554 = vmatprep.subr.bf16.mxu0 0
        %555 = vmatpush1.bf16.xpose.msra.mxu0 0
        %556 = vmatprep.subr.bf16.mxu0 0
        %557 = vmatpush1.bf16.xpose.msra.mxu0 0
        %558 = vmatprep.subr.bf16.mxu0 0
        %559 = vmatpush1.bf16.xpose.msra.mxu0 0
        %560 = vmatprep.subr.bf16.mxu0 0
        %561 = vmatpush1.bf16.xpose.msra.mxu0 0
        %562 = vmatprep.subr.bf16.mxu0 0
        %563 = vmatpush1.bf16.xpose.msra.mxu0 0
        %564 = vmatprep.subr.bf16.mxu0 0
        %565 = vmatpush1.bf16.xpose.msra.mxu0 0
        %566 = vmatprep.subr.bf16.mxu0 0
        %567 = vmatpush1.bf16.xpose.msra.mxu0 %v550
        %568 = vmatprep.subr.bf16.mxu0 0
        %569 = vmatpush2.bf16.xpose.msra.mxu0 0
        %570 = vmatprep.subr.bf16.mxu0 0
        %571 = vmatpush2.bf16.xpose.msra.mxu0 0
        %572 = vmatprep.subr.bf16.mxu0 0
        %573 = vmatpush2.bf16.xpose.msra.mxu0 0
        %574 = vmatprep.subr.bf16.mxu0 0
        %575 = vmatpush2.bf16.xpose.msra.mxu0 0
        %576 = vmatprep.subr.bf16.mxu0 0
        %577 = vmatpush2.bf16.xpose.msra.mxu0 0
        %578 = vmatprep.subr.bf16.mxu0 0
        %579 = vmatpush2.bf16.xpose.msra.mxu0 0
        %580 = vmatprep.subr.bf16.mxu0 0
        %581 = vmatpush2.bf16.xpose.msra.mxu0 0
        %582 = vmatprep.subr.bf16.mxu0 0
        %583 = vmatpush2.bf16.xpose.msra.mxu0 0
        %584 = vmatprep.mubr.bf16.mxu0 0
        %585 = vmatmul.mubr.bf16.gmra.mxu0 %v547
        %v586 = vpop.f32.mrf.mxu0
        %v587 = vadd.f32 0.0, %v586
        %v588 = vpop.f32.mrf.mxu0
        %v589 = vpop.f32.mrf.mxu0
        %v590 = vpop.f32.mrf.mxu0
        %591 = vdwg.mxu0
        %v592 = vsel %vm433, %v587, -inf
        %593 = vmax.xlane.f32.xlu0 %v592
        %v594 = vpop.xlane.xlu0 %593
        %v595 = vsub.f32 %v587, %v594
        %v596 = vmul.f32 %v595, 1.442695
        %v597 = vpow.pop %v596
        %v598 = vsel %vm433, %v597, 0.0
        %599 = vadd.xlane.f32.xlu0 %v598
        %v600 = vpop.xlane.xlu0 %599
        %v601 = vrcp.pop %v600
        %v602 = vmul.f32 %v597, %v601
        %v603 = vpack.c.bf16 %v602, %v602
        %604 = vrot.lane.b32.xlu0 %v429, 56
        %v605 = vpop.permute.xlu0 %604
        %v607 = vsel %vm433, %v603, 0
        %v610 = vsel %vm497, %v605, 0
        %612 = vmatprep.subr.bf16.mxu0 0
        %613 = vmatpush1.bf16.msra.mxu0 0
        %614 = vmatprep.subr.bf16.mxu0 0
        %615 = vmatpush1.bf16.msra.mxu0 0
        %616 = vmatprep.subr.bf16.mxu0 0
        %617 = vmatpush1.bf16.msra.mxu0 0
        %618 = vmatprep.subr.bf16.mxu0 0
        %619 = vmatpush1.bf16.msra.mxu0 0
        %620 = vmatprep.subr.bf16.mxu0 0
        %621 = vmatpush1.bf16.msra.mxu0 0
        %622 = vmatprep.subr.bf16.mxu0 0
        %623 = vmatpush1.bf16.msra.mxu0 0
        %624 = vmatprep.subr.bf16.mxu0 0
        %625 = vmatpush1.bf16.msra.mxu0 0
        %626 = vmatprep.subr.bf16.mxu0 0
        %627 = vmatpush1.bf16.msra.mxu0 %v610
        %628 = vmatprep.subr.bf16.mxu0 0
        %629 = vmatpush2.bf16.msra.mxu0 0
        %630 = vmatprep.subr.bf16.mxu0 0
        %631 = vmatpush2.bf16.msra.mxu0 0
        %632 = vmatprep.subr.bf16.mxu0 0
        %633 = vmatpush2.bf16.msra.mxu0 0
        %634 = vmatprep.subr.bf16.mxu0 0
        %635 = vmatpush2.bf16.msra.mxu0 0
        %636 = vmatprep.subr.bf16.mxu0 0
        %637 = vmatpush2.bf16.msra.mxu0 0
        %638 = vmatprep.subr.bf16.mxu0 0
        %639 = vmatpush2.bf16.msra.mxu0 0
        %640 = vmatprep.subr.bf16.mxu0 0
        %641 = vmatpush2.bf16.msra.mxu0 0
        %642 = vmatprep.subr.bf16.mxu0 0
        %643 = vmatpush2.bf16.msra.mxu0 0
        %644 = vmatprep.mubr.bf16.mxu0 0
        %645 = vmatmul.mubr.bf16.gmra.mxu0 %v607
        %v646 = vpop.f32.mrf.mxu0
        %v647 = vadd.f32 0.0, %v646
        %v648 = vpop.f32.mrf.mxu0
        %v649 = vpop.f32.mrf.mxu0
        %v650 = vpop.f32.mrf.mxu0
        %651 = vdwg.mxu0
        %653 = vrot.lane.b32.xlu0 %v647, 8
        %v654 = vpop.permute.xlu0 %653
        %vm656 = vcmask 130112
        %657 = vst.msk [vmem:[#allocation2] sm:$0xff] %vm656, %v654
        %658 = vrot.lane.b32.xlu0 %v429, 112
        %v659 = vpop.permute.xlu0 %658
        %660 = vrot.lane.b32.xlu0 %v429, 80
        %v661 = vpop.permute.xlu0 %660
        %v663 = vsel %vm433, %v659, 0
        %v666 = vsel %vm433, %v661, 0
        %668 = vmatprep.subr.bf16.mxu0 0
        %669 = vmatpush1.bf16.xpose.msra.mxu0 0
        %670 = vmatprep.subr.bf16.mxu0 0
        %671 = vmatpush1.bf16.xpose.msra.mxu0 0
        %672 = vmatprep.subr.bf16.mxu0 0
        %673 = vmatpush1.bf16.xpose.msra.mxu0 0
        %674 = vmatprep.subr.bf16.mxu0 0
        %675 = vmatpush1.bf16.xpose.msra.mxu0 0
        %676 = vmatprep.subr.bf16.mxu0 0
        %677 = vmatpush1.bf16.xpose.msra.mxu0 0
        %678 = vmatprep.subr.bf16.mxu0 0
        %679 = vmatpush1.bf16.xpose.msra.mxu0 0
        %680 = vmatprep.subr.bf16.mxu0 0
        %681 = vmatpush1.bf16.xpose.msra.mxu0 0
        %682 = vmatprep.subr.bf16.mxu0 0
        %683 = vmatpush1.bf16.xpose.msra.mxu0 %v666
        %684 = vmatprep.subr.bf16.mxu0 0
        %685 = vmatpush2.bf16.xpose.msra.mxu0 0
        %686 = vmatprep.subr.bf16.mxu0 0
        %687 = vmatpush2.bf16.xpose.msra.mxu0 0
        %688 = vmatprep.subr.bf16.mxu0 0
        %689 = vmatpush2.bf16.xpose.msra.mxu0 0
        %690 = vmatprep.subr.bf16.mxu0 0
        %691 = vmatpush2.bf16.xpose.msra.mxu0 0
        %692 = vmatprep.subr.bf16.mxu0 0
        %693 = vmatpush2.bf16.xpose.msra.mxu0 0
        %694 = vmatprep.subr.bf16.mxu0 0
        %695 = vmatpush2.bf16.xpose.msra.mxu0 0
        %696 = vmatprep.subr.bf16.mxu0 0
        %697 = vmatpush2.bf16.xpose.msra.mxu0 0
        %698 = vmatprep.subr.bf16.mxu0 0
        %699 = vmatpush2.bf16.xpose.msra.mxu0 0
        %700 = vmatprep.mubr.bf16.mxu0 0
        %701 = vmatmul.mubr.bf16.gmra.mxu0 %v663
        %v702 = vpop.f32.mrf.mxu0
        %v703 = vadd.f32 0.0, %v702
        %v704 = vpop.f32.mrf.mxu0
        %v705 = vpop.f32.mrf.mxu0
        %v706 = vpop.f32.mrf.mxu0
        %707 = vdwg.mxu0
        %v708 = vsel %vm433, %v703, -inf
        %709 = vmax.xlane.f32.xlu0 %v708
        %v710 = vpop.xlane.xlu0 %709
        %v711 = vsub.f32 %v703, %v710
        %v712 = vmul.f32 %v711, 1.442695
        %v713 = vpow.pop %v712
        %v714 = vsel %vm433, %v713, 0.0
        %715 = vadd.xlane.f32.xlu0 %v714
        %v716 = vpop.xlane.xlu0 %715
        %v717 = vrcp.pop %v716
        %v718 = vmul.f32 %v713, %v717
        %v719 = vpack.c.bf16 %v718, %v718
        %720 = vrot.lane.b32.xlu0 %v429, 48
        %v721 = vpop.permute.xlu0 %720
        %v723 = vsel %vm433, %v719, 0
        %v726 = vsel %vm497, %v721, 0
        %728 = vmatprep.subr.bf16.mxu0 0
        %729 = vmatpush1.bf16.msra.mxu0 0
        %730 = vmatprep.subr.bf16.mxu0 0
        %731 = vmatpush1.bf16.msra.mxu0 0
        %732 = vmatprep.subr.bf16.mxu0 0
        %733 = vmatpush1.bf16.msra.mxu0 0
        %734 = vmatprep.subr.bf16.mxu0 0
        %735 = vmatpush1.bf16.msra.mxu0 0
        %736 = vmatprep.subr.bf16.mxu0 0
        %737 = vmatpush1.bf16.msra.mxu0 0
        %738 = vmatprep.subr.bf16.mxu0 0
        %739 = vmatpush1.bf16.msra.mxu0 0
        %740 = vmatprep.subr.bf16.mxu0 0
        %741 = vmatpush1.bf16.msra.mxu0 0
        %742 = vmatprep.subr.bf16.mxu0 0
        %743 = vmatpush1.bf16.msra.mxu0 %v726
        %744 = vmatprep.subr.bf16.mxu0 0
        %745 = vmatpush2.bf16.msra.mxu0 0
        %746 = vmatprep.subr.bf16.mxu0 0
        %747 = vmatpush2.bf16.msra.mxu0 0
        %748 = vmatprep.subr.bf16.mxu0 0
        %749 = vmatpush2.bf16.msra.mxu0 0
        %750 = vmatprep.subr.bf16.mxu0 0
        %751 = vmatpush2.bf16.msra.mxu0 0
        %752 = vmatprep.subr.bf16.mxu0 0
        %753 = vmatpush2.bf16.msra.mxu0 0
        %754 = vmatprep.subr.bf16.mxu0 0
        %755 = vmatpush2.bf16.msra.mxu0 0
        %756 = vmatprep.subr.bf16.mxu0 0
        %757 = vmatpush2.bf16.msra.mxu0 0
        %758 = vmatprep.subr.bf16.mxu0 0
        %759 = vmatpush2.bf16.msra.mxu0 0
        %760 = vmatprep.mubr.bf16.mxu0 0
        %761 = vmatmul.mubr.bf16.gmra.mxu0 %v723
        %v762 = vpop.f32.mrf.mxu0
        %v763 = vadd.f32 0.0, %v762
        %v764 = vpop.f32.mrf.mxu0
        %v765 = vpop.f32.mrf.mxu0
        %v766 = vpop.f32.mrf.mxu0
        %767 = vdwg.mxu0
        %769 = vrot.lane.b32.xlu0 %v763, 16
        %v770 = vpop.permute.xlu0 %769
        %vm772 = vcmask 195712
        %773 = vst.msk [vmem:[#allocation2] sm:$0xff] %vm772, %v770
        %774 = vrot.lane.b32.xlu0 %v429, 104
        %v775 = vpop.permute.xlu0 %774
        %776 = vrot.lane.b32.xlu0 %v429, 72
        %v777 = vpop.permute.xlu0 %776
        %v779 = vsel %vm433, %v775, 0
        %v782 = vsel %vm433, %v777, 0
        %784 = vmatprep.subr.bf16.mxu0 0
        %785 = vmatpush1.bf16.xpose.msra.mxu0 0
        %786 = vmatprep.subr.bf16.mxu0 0
        %787 = vmatpush1.bf16.xpose.msra.mxu0 0
        %788 = vmatprep.subr.bf16.mxu0 0
        %789 = vmatpush1.bf16.xpose.msra.mxu0 0
        %790 = vmatprep.subr.bf16.mxu0 0
        %791 = vmatpush1.bf16.xpose.msra.mxu0 0
        %792 = vmatprep.subr.bf16.mxu0 0
        %793 = vmatpush1.bf16.xpose.msra.mxu0 0
        %794 = vmatprep.subr.bf16.mxu0 0
        %795 = vmatpush1.bf16.xpose.msra.mxu0 0
        %796 = vmatprep.subr.bf16.mxu0 0
        %797 = vmatpush1.bf16.xpose.msra.mxu0 0
        %798 = vmatprep.subr.bf16.mxu0 0
        %799 = vmatpush1.bf16.xpose.msra.mxu0 %v782
        %800 = vmatprep.subr.bf16.mxu0 0
        %801 = vmatpush2.bf16.xpose.msra.mxu0 0
        %802 = vmatprep.subr.bf16.mxu0 0
        %803 = vmatpush2.bf16.xpose.msra.mxu0 0
        %804 = vmatprep.subr.bf16.mxu0 0
        %805 = vmatpush2.bf16.xpose.msra.mxu0 0
        %806 = vmatprep.subr.bf16.mxu0 0
        %807 = vmatpush2.bf16.xpose.msra.mxu0 0
        %808 = vmatprep.subr.bf16.mxu0 0
        %809 = vmatpush2.bf16.xpose.msra.mxu0 0
        %810 = vmatprep.subr.bf16.mxu0 0
        %811 = vmatpush2.bf16.xpose.msra.mxu0 0
        %812 = vmatprep.subr.bf16.mxu0 0
        %813 = vmatpush2.bf16.xpose.msra.mxu0 0
        %814 = vmatprep.subr.bf16.mxu0 0
        %815 = vmatpush2.bf16.xpose.msra.mxu0 0
        %816 = vmatprep.mubr.bf16.mxu0 0
        %817 = vmatmul.mubr.bf16.gmra.mxu0 %v779
        %v818 = vpop.f32.mrf.mxu0
        %v819 = vadd.f32 0.0, %v818
        %v820 = vpop.f32.mrf.mxu0
        %v821 = vpop.f32.mrf.mxu0
        %v822 = vpop.f32.mrf.mxu0
        %823 = vdwg.mxu0
        %v824 = vsel %vm433, %v819, -inf
        %825 = vmax.xlane.f32.xlu0 %v824
        %v826 = vpop.xlane.xlu0 %825
        %v827 = vsub.f32 %v819, %v826
        %v828 = vmul.f32 %v827, 1.442695
        %v829 = vpow.pop %v828
        %v830 = vsel %vm433, %v829, 0.0
        %831 = vadd.xlane.f32.xlu0 %v830
        %v832 = vpop.xlane.xlu0 %831
        %v833 = vrcp.pop %v832
        %v834 = vmul.f32 %v829, %v833
        %v835 = vpack.c.bf16 %v834, %v834
        %836 = vrot.lane.b32.xlu0 %v429, 40
        %v837 = vpop.permute.xlu0 %836
        %v839 = vsel %vm433, %v835, 0
        %v842 = vsel %vm497, %v837, 0
        %844 = vmatprep.subr.bf16.mxu0 0
        %845 = vmatpush1.bf16.msra.mxu0 0
        %846 = vmatprep.subr.bf16.mxu0 0
        %847 = vmatpush1.bf16.msra.mxu0 0
        %848 = vmatprep.subr.bf16.mxu0 0
        %849 = vmatpush1.bf16.msra.mxu0 0
        %850 = vmatprep.subr.bf16.mxu0 0
        %851 = vmatpush1.bf16.msra.mxu0 0
        %852 = vmatprep.subr.bf16.mxu0 0
        %853 = vmatpush1.bf16.msra.mxu0 0
        %854 = vmatprep.subr.bf16.mxu0 0
        %855 = vmatpush1.bf16.msra.mxu0 0
        %856 = vmatprep.subr.bf16.mxu0 0
        %857 = vmatpush1.bf16.msra.mxu0 0
        %858 = vmatprep.subr.bf16.mxu0 0
        %859 = vmatpush1.bf16.msra.mxu0 %v842
        %860 = vmatprep.subr.bf16.mxu0 0
        %861 = vmatpush2.bf16.msra.mxu0 0
        %862 = vmatprep.subr.bf16.mxu0 0
        %863 = vmatpush2.bf16.msra.mxu0 0
        %864 = vmatprep.subr.bf16.mxu0 0
        %865 = vmatpush2.bf16.msra.mxu0 0
        %866 = vmatprep.subr.bf16.mxu0 0
        %867 = vmatpush2.bf16.msra.mxu0 0
        %868 = vmatprep.subr.bf16.mxu0 0
        %869 = vmatpush2.bf16.msra.mxu0 0
        %870 = vmatprep.subr.bf16.mxu0 0
        %871 = vmatpush2.bf16.msra.mxu0 0
        %872 = vmatprep.subr.bf16.mxu0 0
        %873 = vmatpush2.bf16.msra.mxu0 0
        %874 = vmatprep.subr.bf16.mxu0 0
        %875 = vmatpush2.bf16.msra.mxu0 0
        %876 = vmatprep.mubr.bf16.mxu0 0
        %877 = vmatmul.mubr.bf16.gmra.mxu0 %v839
        %v878 = vpop.f32.mrf.mxu0
        %v879 = vadd.f32 0.0, %v878
        %v880 = vpop.f32.mrf.mxu0
        %v881 = vpop.f32.mrf.mxu0
        %v882 = vpop.f32.mrf.mxu0
        %883 = vdwg.mxu0
        %885 = vrot.lane.b32.xlu0 %v879, 24
        %v886 = vpop.permute.xlu0 %885
        %vm888 = vcmask 261312
        %889 = vst.msk [vmem:[#allocation2] sm:$0xff] %vm888, %v886
        %v890 = vld [vmem:[#allocation2] sm:$0xff]
        %v891 = vpack.c.bf16 %v890, %v890
        %v892 = vld [vmem:[%s322] sm:$0xf]
        %v893 = vld [vmem:[%s322 + $0x4] sm:$0xf]
        %v894 = vld [vmem:[%s322 + $0x8] sm:$0xf]
        %v895 = vld [vmem:[%s322 + $0xc] sm:$0xf]
        %v896 = vlaneseq
        %v897 = vshrl.u32 %v896, 7
        %v898 = vsub.s32 0, %v897
        %v899 = vrot.slane %v358, %v898
        %v904 = vunpack.c.l.b16 %v892
        %v905 = vunpack.c.l.b16 %v893
        %v906 = vunpack.c.l.b16 %v894
        %v907 = vunpack.c.l.b16 %v895
        %v908 = vpack.c.b16 %v905, %v904
        %v909 = vpack.c.b16 %v907, %v906
        %v913 = vsel %vm385, %v891, 0
        %915 = vmatprep.subr.bf16.mxu0 0
        %916 = vmatpush1.bf16.msra.mxu0 0
        %917 = vmatprep.subr.bf16.mxu0 0
        %918 = vmatpush1.bf16.msra.mxu0 0
        %919 = vmatprep.subr.bf16.mxu0 0
        %920 = vmatpush1.bf16.msra.mxu0 0
        %921 = vmatprep.subr.bf16.mxu0 0
        %922 = vmatpush1.bf16.msra.mxu0 0
        %923 = vmatprep.subr.bf16.mxu0 0
        %924 = vmatpush1.bf16.msra.mxu0 0
        %925 = vmatprep.subr.bf16.mxu0 0
        %926 = vmatpush1.bf16.msra.mxu0 0
        %927 = vmatprep.subr.bf16.mxu0 0
        %928 = vmatpush1.bf16.msra.mxu0 %v909
        %929 = vmatprep.subr.bf16.mxu0 0
        %930 = vmatpush1.bf16.msra.mxu0 %v908
        %931 = vmatprep.subr.bf16.mxu0 0
        %932 = vmatpush2.bf16.msra.mxu0 0
        %933 = vmatprep.subr.bf16.mxu0 0
        %934 = vmatpush2.bf16.msra.mxu0 0
        %935 = vmatprep.subr.bf16.mxu0 0
        %936 = vmatpush2.bf16.msra.mxu0 0
        %937 = vmatprep.subr.bf16.mxu0 0
        %938 = vmatpush2.bf16.msra.mxu0 0
        %939 = vmatprep.subr.bf16.mxu0 0
        %940 = vmatpush2.bf16.msra.mxu0 0
        %941 = vmatprep.subr.bf16.mxu0 0
        %942 = vmatpush2.bf16.msra.mxu0 0
        %943 = vmatprep.subr.bf16.mxu0 0
        %944 = vmatpush2.bf16.msra.mxu0 0
        %945 = vmatprep.subr.bf16.mxu0 0
        %946 = vmatpush2.bf16.msra.mxu0 0
        %947 = vmatprep.mubr.bf16.mxu0 0
        %948 = vmatmul.mubr.bf16.gmra.mxu0 %v913
        %v949 = vpop.f32.mrf.mxu0
        %v950 = vadd.f32 %v899, %v949
        %v951 = vpop.f32.mrf.mxu0
        %v952 = vpop.f32.mrf.mxu0
        %v953 = vpop.f32.mrf.mxu0
        %954 = vdwg.mxu0
        %v955 = vadd.f32 %v355, %v950
        %v956 = vsel %vm385, %v955, 0.0
        %957 = vadd.xlane.f32.xlu0 %v956
        %v958 = vpop.xlane.xlu0 %957
        %v959 = vrcp.pop 32.0
        %v960 = vmul.f32 %v958, %v959
        %v961 = vmul.f32 %v955, %v955
        %v962 = vsel %vm385, %v961, 0.0
        %963 = vadd.xlane.f32.xlu0 %v962
        %v964 = vpop.xlane.xlu0 %963
        %v965 = vmul.f32 %v964, %v959
        %v966 = vmul.f32 %v960, %v960
        %v967 = vsub.f32 %v965, %v966
        %v968 = vmax.f32 %v967, 0.0
        %v969 = vsub.f32 %v955, %v960
        %v970 = vadd.f32 %v968, 1e-05
        %v971 = vrsqrt.pop %v970
        %v972 = vmul.f32 %v969, %v971
        %v973 = vlaneseq
        %v974 = vshrl.u32 %v973, 7
        %v975 = vsub.s32 0, %v974
        %v976 = vrot.slane %v359, %v975
        %v977 = vmul.f32 %v972, %v976
        %v978 = vlaneseq
        %v979 = vshrl.u32 %v978, 7
        %v980 = vsub.s32 0, %v979
        %v981 = vrot.slane %v360, %v980
        %v982 = vadd.f32 %v977, %v981
        %v983 = vpack.c.bf16 %v982, %v982
        %v984 = vld [vmem:[%s327] sm:$0xf]
        %v985 = vld [vmem:[%s327 + $0x4] sm:$0xf]
        %v986 = vld [vmem:[%s327 + $0x8] sm:$0xf]
        %v987 = vld [vmem:[%s327 + $0xc] sm:$0xf]
        %v988 = vlaneseq
        %v989 = vshrl.u32 %v988, 7
        %v990 = vsub.s32 0, %v989
        %v991 = vrot.slane %v361, %v990
        %v996 = vunpack.c.l.b16 %v984
        %v997 = vunpack.c.l.b16 %v985
        %v998 = vunpack.c.l.b16 %v986
        %v999 = vunpack.c.l.b16 %v987
        %v1000 = vpack.c.b16 %v997, %v996
        %v1001 = vpack.c.b16 %v999, %v998
        %v1005 = vsel %vm385, %v983, 0
        %1007 = vmatprep.subr.bf16.mxu0 0
        %1008 = vmatpush1.bf16.msra.mxu0 0
        %1009 = vmatprep.subr.bf16.mxu0 0
        %1010 = vmatpush1.bf16.msra.mxu0 0
        %1011 = vmatprep.subr.bf16.mxu0 0
        %1012 = vmatpush1.bf16.msra.mxu0 0
        %1013 = vmatprep.subr.bf16.mxu0 0
        %1014 = vmatpush1.bf16.msra.mxu0 0
        %1015 = vmatprep.subr.bf16.mxu0 0
        %1016 = vmatpush1.bf16.msra.mxu0 0
        %1017 = vmatprep.subr.bf16.mxu0 0
        %1018 = vmatpush1.bf16.msra.mxu0 0
        %1019 = vmatprep.subr.bf16.mxu0 0
        %1020 = vmatpush1.bf16.msra.mxu0 %v1001
        %1021 = vmatprep.subr.bf16.mxu0 0
        %1022 = vmatpush1.bf16.msra.mxu0 %v1000
        %1023 = vmatprep.subr.bf16.mxu0 0
        %1024 = vmatpush2.bf16.msra.mxu0 0
        %1025 = vmatprep.subr.bf16.mxu0 0
        %1026 = vmatpush2.bf16.msra.mxu0 0
        %1027 = vmatprep.subr.bf16.mxu0 0
        %1028 = vmatpush2.bf16.msra.mxu0 0
        %1029 = vmatprep.subr.bf16.mxu0 0
        %1030 = vmatpush2.bf16.msra.mxu0 0
        %1031 = vmatprep.subr.bf16.mxu0 0
        %1032 = vmatpush2.bf16.msra.mxu0 0
        %1033 = vmatprep.subr.bf16.mxu0 0
        %1034 = vmatpush2.bf16.msra.mxu0 0
        %1035 = vmatprep.subr.bf16.mxu0 0
        %1036 = vmatpush2.bf16.msra.mxu0 0
        %1037 = vmatprep.subr.bf16.mxu0 0
        %1038 = vmatpush2.bf16.msra.mxu0 0
        %1039 = vmatprep.mubr.bf16.mxu0 0
        %1040 = vmatmul.mubr.bf16.gmra.mxu0 %v1005
        %v1041 = vpop.f32.mrf.mxu0
        %v1042 = vadd.f32 %v991, %v1041
        %v1043 = vpop.f32.mrf.mxu0
        %v1044 = vpop.f32.mrf.mxu0
        %v1045 = vpop.f32.mrf.mxu0
        %1046 = vdwg.mxu0
        %v1047 = vmul.f32 %v1042, 0.5
        %v1048 = vmul.f32 %v1042, 0.70710677
        %v1049 = verf.f32.pop %v1048
        %v1050 = vadd.f32 %v1049, 1.0
        %v1051 = vmul.f32 %v1047, %v1050
        %v1052 = vpack.c.bf16 %v1051, %v1051
        %v1053 = vld [vmem:[%s332] sm:$0xf]
        %v1054 = vld [vmem:[%s332 + $0x4] sm:$0xf]
        %v1055 = vld [vmem:[%s332 + $0x8] sm:$0xf]
        %v1056 = vld [vmem:[%s332 + $0xc] sm:$0xf]
        %v1057 = vld [vmem:[%s332 + $0x10] sm:$0xf]
        %v1058 = vld [vmem:[%s332 + $0x14] sm:$0xf]
        %v1059 = vld [vmem:[%s332 + $0x18] sm:$0xf]
        %v1060 = vld [vmem:[%s332 + $0x1c] sm:$0xf]
        %v1061 = vlaneseq
        %v1062 = vshrl.u32 %v1061, 7
        %v1063 = vsub.s32 0, %v1062
        %v1064 = vrot.slane %v362, %v1063
        %v1073 = vunpack.c.l.b16 %v1053
        %v1074 = vunpack.c.l.b16 %v1054
        %v1075 = vunpack.c.l.b16 %v1055
        %v1076 = vunpack.c.l.b16 %v1056
        %v1077 = vunpack.c.l.b16 %v1057
        %v1078 = vunpack.c.l.b16 %v1058
        %v1079 = vunpack.c.l.b16 %v1059
        %v1080 = vunpack.c.l.b16 %v1060
        %v1081 = vpack.c.b16 %v1074, %v1073
        %v1082 = vpack.c.b16 %v1076, %v1075
        %v1083 = vpack.c.b16 %v1078, %v1077
        %v1084 = vpack.c.b16 %v1080, %v1079
        %vm1089 = vcmask 523264
        %v1091 = vsel %vm1089, %v1052, 0
        %1093 = vmatprep.subr.bf16.mxu0 0
        %1094 = vmatpush1.bf16.msra.mxu0 0
        %1095 = vmatprep.subr.bf16.mxu0 0
        %1096 = vmatpush1.bf16.msra.mxu0 0
        %1097 = vmatprep.subr.bf16.mxu0 0
        %1098 = vmatpush1.bf16.msra.mxu0 0
        %1099 = vmatprep.subr.bf16.mxu0 0
        %1100 = vmatpush1.bf16.msra.mxu0 0
        %1101 = vmatprep.subr.bf16.mxu0 0
        %1102 = vmatpush1.bf16.msra.mxu0 %v1084
        %1103 = vmatprep.subr.bf16.mxu0 0
        %1104 = vmatpush1.bf16.msra.mxu0 %v1083
        %1105 = vmatprep.subr.bf16.mxu0 0
        %1106 = vmatpush1.bf16.msra.mxu0 %v1082
        %1107 = vmatprep.subr.bf16.mxu0 0
        %1108 = vmatpush1.bf16.msra.mxu0 %v1081
        %1109 = vmatprep.subr.bf16.mxu0 0
        %1110 = vmatpush2.bf16.msra.mxu0 0
        %1111 = vmatprep.subr.bf16.mxu0 0
        %1112 = vmatpush2.bf16.msra.mxu0 0
        %1113 = vmatprep.subr.bf16.mxu0 0
        %1114 = vmatpush2.bf16.msra.mxu0 0
        %1115 = vmatprep.subr.bf16.mxu0 0
        %1116 = vmatpush2.bf16.msra.mxu0 0
        %1117 = vmatprep.subr.bf16.mxu0 0
        %1118 = vmatpush2.bf16.msra.mxu0 0
        %1119 = vmatprep.subr.bf16.mxu0 0
        %1120 = vmatpush2.bf16.msra.mxu0 0
        %1121 = vmatprep.subr.bf16.mxu0 0
        %1122 = vmatpush2.bf16.msra.mxu0 0
        %1123 = vmatprep.subr.bf16.mxu0 0
        %1124 = vmatpush2.bf16.msra.mxu0 0
        %1125 = vmatprep.mubr.bf16.mxu0 0
        %1126 = vmatmul.mubr.bf16.gmra.mxu0 %v1091
        %v1127 = vpop.f32.mrf.mxu0
        %v1128 = vadd.f32 %v1064, %v1127
        %v1129 = vpop.f32.mrf.mxu0
        %v1130 = vpop.f32.mrf.mxu0
        %v1131 = vpop.f32.mrf.mxu0
        %1132 = vdwg.mxu0
        %v1133 = vadd.f32 %v982, %v1128
        %v1134 = vsel %vm385, %v1133, 0.0
        %1135 = vadd.xlane.f32.xlu0 %v1134
        %v1136 = vpop.xlane.xlu0 %1135
        %v1137 = vmul.f32 %v1136, %v959
        %v1138 = vmul.f32 %v1133, %v1133
        %v1139 = vsel %vm385, %v1138, 0.0
        %1140 = vadd.xlane.f32.xlu0 %v1139
        %v1141 = vpop.xlane.xlu0 %1140
        %v1142 = vmul.f32 %v1141, %v959
        %v1143 = vmul.f32 %v1137, %v1137
        %v1144 = vsub.f32 %v1142, %v1143
        %v1145 = vmax.f32 %v1144, 0.0
        %v1146 = vsub.f32 %v1133, %v1137
        %v1147 = vadd.f32 %v1145, 1e-05
        %v1148 = vrsqrt.pop %v1147
        %v1149 = vmul.f32 %v1146, %v1148
        %v1150 = vlaneseq
        %v1151 = vshrl.u32 %v1150, 7
        %v1152 = vsub.s32 0, %v1151
        %v1153 = vrot.slane %v363, %v1152
        %v1154 = vmul.f32 %v1149, %v1153
        %v1155 = vlaneseq
        %v1156 = vshrl.u32 %v1155, 7
        %v1157 = vsub.s32 0, %v1156
        %v1158 = vrot.slane %v364, %v1157
        %v1159 = vadd.f32 %v1154, %v1158
        %1160 = vst.msk [vmem:[%s312] sm:$0xff] %vm385, %v1159
        %s1161 = sand.u32 %s173, 1
        %s1162 = scalar_lea.sflag [#allocation6], %s1161
        %s1163 = sand.u32 %s173, 1
        %s1164 = smul.addr %s1163, 8
        %s1165 = scalar_lea.vmem [#allocation7], %s1164
        // Predicated region
        $region53: #{tpu_custom_call.1} parent=39 // pred_check
          %p1166 = pneg %p183
        $region54: #{tpu_custom_call.1} parent=39 // pred_check_branch
          %1168 = sbr.rel (%p1166) target = $region56
        $region55: #{tpu_custom_call.1} parent=39 // pred_region
          %s1170 = ssub.s32 128, 128
          %1171 = vsyncadd %s1162, %s1170
          %s1172 = smul.addr %s27, 128
          %s1173 = scalar_lea.hbm %s6, %s1172
          %s1175 = sshll.u32 %s1165, 4
          %s1176 = int_to_ptr.vmem [resolvable:$true] %s1175
          %1178 = dma.vmem_to_hbm [thread:$0]  %s1176, 128, %s1173, %s1162
        $region56: #{tpu_custom_call.1} parent=39 // pred_fallthru
          _
      $region40: #{tpu_custom_call.1} parent=5 // pred_fallthru
        _
      %p1179 = scmp.le.s32.totalorder 2, %s18
      // Predicated region
      $region57: #{tpu_custom_call.1} parent=5 // pred_check
        %p1180 = pneg %p1179
      $region58: #{tpu_custom_call.1} parent=5 // pred_check_branch
        %1182 = sbr.rel (%p1180) target = $region60
      $region59: #{tpu_custom_call.1} parent=5 // pred_region
        %s1183 = ssub.s32 %s18, 2
        // Predicated region
        $region61: #{tpu_custom_call.1} parent=59 // pred_check
          %p1184 = pneg %p189
        $region62: #{tpu_custom_call.1} parent=59 // pred_check_branch
          %1186 = sbr.rel (%p1184) target = $region64
        $region63: #{tpu_custom_call.1} parent=59 // pred_region
          %s1187 = sand.u32 %s174, 1
          %s1188 = scalar_lea.sflag [#allocation6], %s1187
          %s1189 = sand.u32 %s174, 1
          %s1190 = smul.addr %s1189, 8
          %s1191 = scalar_lea.vmem [#allocation7], %s1190
          %1192 = dma.done %s1188, 128
        $region64: #{tpu_custom_call.1} parent=59 // pred_fallthru
          _
      $region60: #{tpu_custom_call.1} parent=5 // pred_fallthru
        _
    $region6: #{tpu_custom_call.1} parent=1 // loop_footer
      %s22 = sadd.s32 1, %s18
    $region7: #{tpu_custom_call.1} parent=1 // loop_footer_branch
      %17 = sbr.rel target = $region3
    $region8: #{tpu_custom_call.1} parent=1 // loop_exit
      _
    %1193 = vsyncpa [#allocation5], 1
    %s1194 = scalar_lea.sflag [#allocation5], 1
    %1195 = vsyncpa %s1194, 1
    %1196 = vsyncpa [#allocation6], 1
    %s1197 = scalar_lea.sflag [#allocation6], 1
    %1198 = vsyncpa %s1197, 1
  %1199 = vsyncmov [#allocation3]
  %s1200 = vpop.sfrf %1199
  %p1201 = scmp.eq.s32.totalorder %s1200, 0
  %p1202 = pneg %p1201
  %1204 = shalt.err (%p1202)

</llo_original>
